<compile_context>
chip_gen: v7x
topology: tpu7x:2x2x1
jax: 0.10.0
libtpu: 0.0.40
codegen_flags: <defaults>
</compile_context>

<pallas_src>
import functools
import math

import jax
import jax.numpy as jnp
from jax.experimental import pallas as pl
from jax.experimental.pallas import tpu as pltpu

EPS = 1e-6  # LayerNorm eps (config.norm_layer)


# ------------------------- Pallas kernel -------------------------

def _patch_embed_kernel(x_ref, p1_ref, w_ref, p2_ref, pos_ref, o_ref, *,
                        patch, c1, pair, eps):
    """Fused: norm0 -> {avg-pool residual, patchify conv} -> norm + tiled residual
    -> RPReLU -> + position embeddings, for one (output-row strip, batch) block."""
    _, h_tile, _, wg, _ = x_ref.shape        # (1, h_tile, patch, W2//pair, pair*patch*C1)
    c2t = o_ref.shape[-1]                    # pair * C2 (lane-dense output row width)
    c2 = c2t // pair
    n2 = h_tile * wg                         # output rows in this block (pair tokens each)
    rep = c2 // c1
    inv_pp = 1.0 / (patch * patch)

    x = x_ref[0]                             # (h_tile, patch, wg, pair*patch*C1)

    # hoisted norm0 affine broadcasts (do NOT re-materialize inside the unrolled loop)
    g0 = jnp.broadcast_to(p1_ref[0:1, :].astype(jnp.float32), (n2, c1))
    b0 = jnp.broadcast_to(p1_ref[1:2, :].astype(jnp.float32), (n2, c1))

    slabs, residuals = [], []
    for s in range(pair):                    # token position within a 128-lane output row
        parts = []
        res = jnp.zeros((n2, c1), jnp.float32)
        for di in range(patch):
            for dj in range(patch):
                lo = (s * patch + dj) * c1
                xs = x[:, di, :, lo:lo + c1].astype(jnp.float32).reshape(n2, c1)
                # norm0: LayerNorm over C1 (per original token)
                mu = jnp.mean(xs, axis=-1, keepdims=True)
                var = jnp.mean((xs - mu) ** 2, axis=-1, keepdims=True)
                xs = (xs - mu) * jax.lax.rsqrt(var + eps) * g0 + b0
                res = res + xs               # AvgPool2d(patch, patch) == mean over offsets
                parts.append(xs)             # slab columns ordered (di, dj, c) to match w
        slabs.append(jnp.concatenate(parts, axis=-1))        # (n2, patch*patch*C1)
        residuals.append(res * inv_pp)

    # ONE fused patchify-conv matmul: K = patch*patch*C1, bf16 operands, f32 accumulation
    slab = jnp.concatenate(slabs, axis=0).astype(jnp.bfloat16)       # (pair*n2, K)
    acc = jnp.dot(slab, w_ref[...], preferred_element_type=jnp.float32)
    acc = acc + p2_ref[0:1, 0:c2]            # folded conv(move) bias = move @ sum_k W_k

    # norm: LayerNorm statistics over C2, per token
    mu2 = jnp.mean(acc, axis=-1, keepdims=True)
    var2 = jnp.mean((acc - mu2) ** 2, axis=-1, keepdims=True)
    xn = (acc - mu2) * jax.lax.rsqrt(var2 + eps)                     # (pair*n2, C2)

    # regroup to lane-dense (n2, pair*C2) output rows: token s -> lanes [s*C2, (s+1)*C2)
    xn_cat = jnp.concatenate([xn[s * n2:(s + 1) * n2] for s in range(pair)], axis=-1)
    # channel-tiled residual: torch.concat([residual] * (C2 // C1), dim=-1), per token slot
    res_cat = jnp.concatenate(
        [residuals[s] for s in range(pair) for _ in range(rep)], axis=-1)

    y = xn_cat * p2_ref[1:2, :] + p2_ref[2:3, :] + res_cat          # norm affine + residual
    t = y - p2_ref[3:4, :]                                          # RPReLU
    y = jnp.where(t >= 0, t, p2_ref[4:5, :] * t) + p2_ref[5:6, :]

    # + position embeddings; unmasked lane-dense store
    o_ref[0] = (y + pos_ref[0].astype(jnp.float32)).astype(o_ref.dtype)


# ------------------------- tiling heuristics -------------------------

def _ru(v, m):
    return -(-v // m) * m


def _vmem_capacity_bytes():
    try:
        return int(getattr(pltpu.get_tpu_info(), "vmem_capacity_bytes", 64 << 20))
    except Exception:
        return 64 << 20          # assume the smallest (v7x) VMEM if the query fails


def _estimate_vmem(h, wg, pair, patch, c1, c2, elem_bytes):
    """(8,128)-tile-padded block bytes (double-buffered) + in-kernel f32 live values."""
    lane_in = pair * patch * c1
    c2t = pair * c2
    k = patch * patch * c1
    n2 = h * wg
    n_tok = pair * n2
    x_blk = h * patch * _ru(wg, 8) * _ru(lane_in, 128) * elem_bytes * 2
    io_blk = _ru(n2, 8) * _ru(c2t, 128) * elem_bytes * 2            # out block (pos alike)
    params = (_ru(2, 8) * _ru(c1, 128) + _ru(6, 8) * _ru(c2t, 128)) * 4 \
        + _ru(k, 16) * _ru(c2, 128) * 2                             # bf16 weight
    live = (n_tok * (_ru(k, 128) + _ru(c2, 128))                    # slab + acc/xn
            + 3 * n2 * _ru(c2t, 128)                                # xn_cat / res_cat / y
            + (2 + patch * patch) * n2 * 128) * 4                   # norm0 temps / residuals
    return x_blk + 2 * io_blk + params + live


def _pick_h_tile(h2, wg, pair, patch, c1, c2, batch, elem_bytes, vmem_budget):
    """Largest legal output-row strip fitting the VMEM budget; prefer total grid steps >= 2
    so the DMA pipeline (and both v7x TensorCores) have work."""
    est = lambda h: _estimate_vmem(h, wg, pair, patch, c1, c2, elem_bytes)
    shape_ok = [h for h in range(1, h2 + 1)
                if h2 % h == 0 and ((h * wg) % 8 == 0 or h == h2)]
    fits = [h for h in shape_ok if est(h) <= vmem_budget]
    if not fits:
        return min(shape_ok, key=est)
    multi = [h for h in fits if (h2 // h) * batch >= 2]
    return max(multi) if multi else max(fits)


# ------------------------- wrapper -------------------------

def binary_patch_embed(hidden_states, params, *, img_size, patch_size, h_tile=None):
    B, N1, C1 = hidden_states.shape
    H = W = img_size
    assert N1 == H * W
    p = patch_size
    assert H % p == 0 and W % p == 0
    H2, W2 = H // p, W // p
    N2 = H2 * W2
    w = params["proj_w"]                     # torch conv layout (C2, C1, p, p)
    C2 = w.shape[0]
    assert C2 % C1 == 0
    out_dtype = hidden_states.dtype
    elem_bytes = jnp.dtype(out_dtype).itemsize

    # lane-dense output packing: `pair` consecutive tokens per 128-lane output row
    pair = 1
    if C2 < 128 and 128 % C2 == 0 and W2 % (128 // C2) == 0:
        pair = 128 // C2
    Wg = W2 // pair
    lane_in = pair * p * C1
    K = p * p * C1

    # weight (C2, C1, p, p) -> (p*p*C1, C2) in bf16 for the MXU; fold the per-channel
    # `move` shift into a bias: conv(x + move) == conv(x) + move @ sum_k W_k  (fp path)
    w_r = jnp.transpose(w, (2, 3, 1, 0)).astype(jnp.float32)          # (p, p, C1, C2)
    move_bias = jnp.einsum("c,ijcd->d", params["move"].reshape(C1), w_r)
    w_flat = w_r.reshape(K, C2).astype(jnp.bfloat16)

    # pack per-channel parameter rows (C2-params lane-tiled to the paired row width)
    pack1 = jnp.stack([params["g0"], params["b0"]], 0).astype(jnp.float32)       # (2, C1)
    pack2 = jnp.tile(jnp.stack([move_bias, params["g"], params["b"],
                                params["rp_m1"], params["rp_a"], params["rp_m2"]], 0),
                     (1, pair)).astype(jnp.float32)                              # (6, pair*C2)
    pos = params["pos"].reshape(1, N2 // pair, pair * C2).astype(out_dtype)      # free reshape

    # free row-major regroup: (B, H*W, C1) -> (B, H2, p, W2//pair, pair*p*C1)
    x6 = hidden_states.reshape(B, H2, p, Wg, lane_in)

    cap = _vmem_capacity_bytes()
    if h_tile is None:
        h_tile = _pick_h_tile(H2, Wg, pair, p, C1, C2, B, elem_bytes, cap // 2)
    assert H2 % h_tile == 0 and ((h_tile * Wg) % 8 == 0 or h_tile == H2)
    est = _estimate_vmem(h_tile, Wg, pair, p, C1, C2, elem_bytes)
    vmem_limit = int(min(cap, max(32 << 20, 2 * est)))

    n2_strip = h_tile * Wg
    kernel = functools.partial(_patch_embed_kernel, patch=p, c1=C1, pair=pair, eps=EPS)
    out = pl.pallas_call(
        kernel,
        out_shape=jax.ShapeDtypeStruct((B, N2 // pair, pair * C2), out_dtype),
        # batch is the inner grid axis: pos / parameter / weight blocks keep the same block
        # index between consecutive steps and are not re-fetched from HBM.
        grid=(H2 // h_tile, B),
        in_specs=[
            pl.BlockSpec((1, h_tile, p, Wg, lane_in), lambda i, b: (b, i, 0, 0, 0)),
            pl.BlockSpec((2, C1), lambda i, b: (0, 0)),
            pl.BlockSpec((K, C2), lambda i, b: (0, 0)),
            pl.BlockSpec((6, pair * C2), lambda i, b: (0, 0)),
            pl.BlockSpec((1, n2_strip, pair * C2), lambda i, b: (0, i, 0)),
        ],
        out_specs=pl.BlockSpec((1, n2_strip, pair * C2), lambda i, b: (b, i, 0)),
        compiler_params=pltpu.CompilerParams(
            dimension_semantics=("parallel", "parallel"),
            vmem_limit_bytes=vmem_limit),
    )(x6, pack1, w_flat, pack2, pos)
    return out.reshape(B, N2, C2)


# ------------------------- pure-JAX reference (for a sanity check) -------------------------

def reference_forward(hidden_states, prm, *, img_size, patch_size):
    B, N1, C1 = hidden_states.shape
    H = W = img_size
    p = patch_size
    H2, W2 = H // p, W // p
    C2 = prm["proj_w"].shape[0]

    x = hidden_states
    mu = x.mean(-1, keepdims=True)
    var = ((x - mu) ** 2).mean(-1, keepdims=True)
    xn = (x - mu) * jax.lax.rsqrt(var + EPS) * prm["g0"] + prm["b0"]       # norm0

    img = xn.reshape(B, H, W, C1)
    pooled = img.reshape(B, H2, p, W2, p, C1).mean(axis=(2, 4))            # AvgPool2d
    residual = pooled.reshape(B, H2 * W2, C1)
    residual = jnp.concatenate([residual] * (C2 // C1), axis=-1)

    xin = img + prm["move"].reshape(C1)
    patches = xin.reshape(B, H2, p, W2, p, C1).transpose(0, 1, 3, 2, 4, 5)
    wt = jnp.transpose(prm["proj_w"], (2, 3, 1, 0)).reshape(p * p * C1, C2)
    conv = patches.reshape(B, H2 * W2, p * p * C1) @ wt                    # proj

    mu2 = conv.mean(-1, keepdims=True)
    var2 = ((conv - mu2) ** 2).mean(-1, keepdims=True)
    y = (conv - mu2) * jax.lax.rsqrt(var2 + EPS) * prm["g"] + prm["b"] + residual
    t = y - prm["rp_m1"]
    y = jnp.where(t >= 0, t, prm["rp_a"] * t) + prm["rp_m2"]               # RPReLU
    return y + prm["pos"]


# ------------------------- deterministic parameter init -------------------------

def init_params(key, in_dim, out_dim, img_size, patch):
    # (torch inits the move/rprelu shifts to zeros; small randoms here exercise the paths)
    ks = jax.random.split(key, 5)
    bound = 1.0 / math.sqrt(in_dim * patch * patch)
    n2 = (img_size // patch) * (img_size // patch)
    return {
        "g0": jnp.ones((in_dim,), jnp.float32),
        "b0": jnp.zeros((in_dim,), jnp.float32),
        "move": 0.01 * jax.random.normal(ks[0], (1, in_dim, 1, 1), jnp.float32),
        "proj_w": jax.random.uniform(ks[1], (out_dim, in_dim, patch, patch),
                                     jnp.float32, -bound, bound),
        "g": jnp.ones((out_dim,), jnp.float32),
        "b": jnp.zeros((out_dim,), jnp.float32),
        "rp_m1": 0.01 * jax.random.normal(ks[2], (out_dim,), jnp.float32),
        "rp_a": jnp.full((out_dim,), 0.25, jnp.float32),       # PReLU default
        "rp_m2": 0.01 * jax.random.normal(ks[3], (out_dim,), jnp.float32),
        "pos": 0.02 * jax.random.truncated_normal(
            ks[4], -2.0, 2.0, (1, n2, out_dim), jnp.float32),
    }


if __name__ == "__main__":
    B = 2
    in_dim = 16            # C1 (must divide out_dim, as the module's residual concat requires)
    out_dim = 64           # C2
    img_size = 16          # input token grid is img_size x img_size -> N1 = 256
    patch = 2              # patch_size (position_embeddings assume //2, as in the module)

    key = jax.random.PRNGKey(0)
    kx, kp = jax.random.split(key)
    hidden_states = jax.random.normal(kx, (B, img_size * img_size, in_dim), jnp.float32)
    params = init_params(kp, in_dim, out_dim, img_size, patch)

    out = binary_patch_embed(hidden_states, params, img_size=img_size, patch_size=patch)
    out = jax.block_until_ready(out)

    N2 = (img_size // patch) ** 2
    assert out.shape == (B, N2, out_dim)
    assert bool(jnp.all(jnp.isfinite(out)))

    ref = reference_forward(hidden_states, params, img_size=img_size, patch_size=patch)
    max_err = float(jnp.max(jnp.abs(out - ref)))
    assert max_err < 5e-2, f"kernel vs reference mismatch: {max_err}"

    print("KERNEL_OK")
</pallas_src>

<mosaic_0001>
module attributes {stable_mosaic.version = 11 : i64} {
  func.func @_patch_embed_kernel(%arg0: i32, %arg1: i32, %arg2: memref<1x8x2x4x64xf32, #tpu.memory_space<vmem>>, %arg3: memref<2x16xf32, #tpu.memory_space<vmem>>, %arg4: memref<64x64xbf16, #tpu.memory_space<vmem>>, %arg5: memref<6x128xf32, #tpu.memory_space<vmem>>, %arg6: memref<1x32x128xf32, #tpu.memory_space<vmem>>, %arg7: memref<1x32x128xf32, #tpu.memory_space<vmem>>) attributes {dimension_semantics = [#tpu.dimension_semantics<parallel>, #tpu.dimension_semantics<parallel>], iteration_bounds = array<i64: 1, 2>, scalar_prefetch = 0 : i64, scratch_operands = 0 : i64, tpu.core_type = #tpu.core_type<tc>, window_params = [{transform_indices = @transform_0, window_bounds = array<i64: 1, 8, 2, 4, 64>}, {pipeline_mode = #tpu.pipeline_mode<synchronous>, transform_indices = @transform_1, window_bounds = array<i64: 2, 16>}, {pipeline_mode = #tpu.pipeline_mode<synchronous>, transform_indices = @transform_2, window_bounds = array<i64: 64, 64>}, {pipeline_mode = #tpu.pipeline_mode<synchronous>, transform_indices = @transform_3, window_bounds = array<i64: 6, 128>}, {transform_indices = @transform_4, window_bounds = array<i64: 1, 32, 128>}, {transform_indices = @transform_5, window_bounds = array<i64: 1, 32, 128>}]} {
    %c0 = arith.constant 0 : index
    %c0_0 = arith.constant 0 : index
    %c0_1 = arith.constant 0 : index
    %c0_2 = arith.constant 0 : index
    %c0_3 = arith.constant 0 : index
    %0 = vector.load %arg2[%c0, %c0_0, %c0_1, %c0_2, %c0_3] : memref<1x8x2x4x64xf32, #tpu.memory_space<vmem>>, vector<1x8x2x4x64xf32>
    %1 = vector.shape_cast %0 : vector<1x8x2x4x64xf32> to vector<8x2x4x64xf32>
    %c0_4 = arith.constant 0 : index
    %c0_5 = arith.constant 0 : index
    %2 = vector.load %arg3[%c0_4, %c0_5] : memref<2x16xf32, #tpu.memory_space<vmem>>, vector<1x16xf32>
    %3 = vector.shape_cast %2 : vector<1x16xf32> to vector<1x16xf32>
    %4 = vector.broadcast %3 : vector<1x16xf32> to vector<32x16xf32>
    %c1 = arith.constant 1 : index
    %c0_6 = arith.constant 0 : index
    %5 = vector.load %arg3[%c1, %c0_6] : memref<2x16xf32, #tpu.memory_space<vmem>>, vector<1x16xf32>
    %6 = vector.shape_cast %5 : vector<1x16xf32> to vector<1x16xf32>
    %7 = vector.broadcast %6 : vector<1x16xf32> to vector<32x16xf32>
    %cst = arith.constant 0.000000e+00 : f32
    %8 = vector.broadcast %cst : f32 to vector<32x16xf32>
    %9 = vector.extract_strided_slice %1 {offsets = [0, 0, 0, 0], sizes = [8, 1, 4, 16], strides = [1, 1, 1, 1]} : vector<8x2x4x64xf32> to vector<8x1x4x16xf32>
    %10 = vector.shape_cast %9 : vector<8x1x4x16xf32> to vector<8x4x16xf32>
    %11 = vector.shape_cast %10 : vector<8x4x16xf32> to vector<32x16xf32>
    %cst_7 = arith.constant dense<0.000000e+00> : vector<32xf32>
    %12 = vector.multi_reduction <add>, %11, %cst_7 [1] : vector<32x16xf32> to vector<32xf32>
    %13 = vector.shape_cast %12 : vector<32xf32> to vector<32x1xf32>
    %cst_8 = arith.constant 1.600000e+01 : f32
    %14 = vector.broadcast %cst_8 : f32 to vector<32x1xf32>
    %15 = arith.divf %13, %14 : vector<32x1xf32>
    %16 = vector.broadcast %15 : vector<32x1xf32> to vector<32x16xf32>
    %17 = arith.subf %11, %16 : vector<32x16xf32>
    %18 = arith.mulf %17, %17 : vector<32x16xf32>
    %cst_9 = arith.constant dense<0.000000e+00> : vector<32xf32>
    %19 = vector.multi_reduction <add>, %18, %cst_9 [1] : vector<32x16xf32> to vector<32xf32>
    %20 = vector.shape_cast %19 : vector<32xf32> to vector<32x1xf32>
    %cst_10 = arith.constant 1.600000e+01 : f32
    %21 = vector.broadcast %cst_10 : f32 to vector<32x1xf32>
    %22 = arith.divf %20, %21 : vector<32x1xf32>
    %23 = vector.broadcast %15 : vector<32x1xf32> to vector<32x16xf32>
    %24 = arith.subf %11, %23 : vector<32x16xf32>
    %cst_11 = arith.constant 9.99999997E-7 : f32
    %25 = vector.broadcast %cst_11 : f32 to vector<32x1xf32>
    %26 = arith.addf %22, %25 : vector<32x1xf32>
    %27 = math.rsqrt %26 : vector<32x1xf32>
    %28 = vector.broadcast %27 : vector<32x1xf32> to vector<32x16xf32>
    %29 = arith.mulf %24, %28 : vector<32x16xf32>
    %30 = arith.mulf %29, %4 : vector<32x16xf32>
    %31 = arith.addf %30, %7 : vector<32x16xf32>
    %32 = arith.addf %8, %31 : vector<32x16xf32>
    %33 = vector.extract_strided_slice %1 {offsets = [0, 0, 0, 16], sizes = [8, 1, 4, 16], strides = [1, 1, 1, 1]} : vector<8x2x4x64xf32> to vector<8x1x4x16xf32>
    %34 = vector.shape_cast %33 : vector<8x1x4x16xf32> to vector<8x4x16xf32>
    %35 = vector.shape_cast %34 : vector<8x4x16xf32> to vector<32x16xf32>
    %cst_12 = arith.constant dense<0.000000e+00> : vector<32xf32>
    %36 = vector.multi_reduction <add>, %35, %cst_12 [1] : vector<32x16xf32> to vector<32xf32>
    %37 = vector.shape_cast %36 : vector<32xf32> to vector<32x1xf32>
    %cst_13 = arith.constant 1.600000e+01 : f32
    %38 = vector.broadcast %cst_13 : f32 to vector<32x1xf32>
    %39 = arith.divf %37, %38 : vector<32x1xf32>
    %40 = vector.broadcast %39 : vector<32x1xf32> to vector<32x16xf32>
    %41 = arith.subf %35, %40 : vector<32x16xf32>
    %42 = arith.mulf %41, %41 : vector<32x16xf32>
    %cst_14 = arith.constant dense<0.000000e+00> : vector<32xf32>
    %43 = vector.multi_reduction <add>, %42, %cst_14 [1] : vector<32x16xf32> to vector<32xf32>
    %44 = vector.shape_cast %43 : vector<32xf32> to vector<32x1xf32>
    %cst_15 = arith.constant 1.600000e+01 : f32
    %45 = vector.broadcast %cst_15 : f32 to vector<32x1xf32>
    %46 = arith.divf %44, %45 : vector<32x1xf32>
    %47 = vector.broadcast %39 : vector<32x1xf32> to vector<32x16xf32>
    %48 = arith.subf %35, %47 : vector<32x16xf32>
    %cst_16 = arith.constant 9.99999997E-7 : f32
    %49 = vector.broadcast %cst_16 : f32 to vector<32x1xf32>
    %50 = arith.addf %46, %49 : vector<32x1xf32>
    %51 = math.rsqrt %50 : vector<32x1xf32>
    %52 = vector.broadcast %51 : vector<32x1xf32> to vector<32x16xf32>
    %53 = arith.mulf %48, %52 : vector<32x16xf32>
    %54 = arith.mulf %53, %4 : vector<32x16xf32>
    %55 = arith.addf %54, %7 : vector<32x16xf32>
    %56 = arith.addf %32, %55 : vector<32x16xf32>
    %57 = vector.extract_strided_slice %1 {offsets = [0, 1, 0, 0], sizes = [8, 1, 4, 16], strides = [1, 1, 1, 1]} : vector<8x2x4x64xf32> to vector<8x1x4x16xf32>
    %58 = vector.shape_cast %57 : vector<8x1x4x16xf32> to vector<8x4x16xf32>
    %59 = vector.shape_cast %58 : vector<8x4x16xf32> to vector<32x16xf32>
    %cst_17 = arith.constant dense<0.000000e+00> : vector<32xf32>
    %60 = vector.multi_reduction <add>, %59, %cst_17 [1] : vector<32x16xf32> to vector<32xf32>
    %61 = vector.shape_cast %60 : vector<32xf32> to vector<32x1xf32>
    %cst_18 = arith.constant 1.600000e+01 : f32
    %62 = vector.broadcast %cst_18 : f32 to vector<32x1xf32>
    %63 = arith.divf %61, %62 : vector<32x1xf32>
    %64 = vector.broadcast %63 : vector<32x1xf32> to vector<32x16xf32>
    %65 = arith.subf %59, %64 : vector<32x16xf32>
    %66 = arith.mulf %65, %65 : vector<32x16xf32>
    %cst_19 = arith.constant dense<0.000000e+00> : vector<32xf32>
    %67 = vector.multi_reduction <add>, %66, %cst_19 [1] : vector<32x16xf32> to vector<32xf32>
    %68 = vector.shape_cast %67 : vector<32xf32> to vector<32x1xf32>
    %cst_20 = arith.constant 1.600000e+01 : f32
    %69 = vector.broadcast %cst_20 : f32 to vector<32x1xf32>
    %70 = arith.divf %68, %69 : vector<32x1xf32>
    %71 = vector.broadcast %63 : vector<32x1xf32> to vector<32x16xf32>
    %72 = arith.subf %59, %71 : vector<32x16xf32>
    %cst_21 = arith.constant 9.99999997E-7 : f32
    %73 = vector.broadcast %cst_21 : f32 to vector<32x1xf32>
    %74 = arith.addf %70, %73 : vector<32x1xf32>
    %75 = math.rsqrt %74 : vector<32x1xf32>
    %76 = vector.broadcast %75 : vector<32x1xf32> to vector<32x16xf32>
    %77 = arith.mulf %72, %76 : vector<32x16xf32>
    %78 = arith.mulf %77, %4 : vector<32x16xf32>
    %79 = arith.addf %78, %7 : vector<32x16xf32>
    %80 = arith.addf %56, %79 : vector<32x16xf32>
    %81 = vector.extract_strided_slice %1 {offsets = [0, 1, 0, 16], sizes = [8, 1, 4, 16], strides = [1, 1, 1, 1]} : vector<8x2x4x64xf32> to vector<8x1x4x16xf32>
    %82 = vector.shape_cast %81 : vector<8x1x4x16xf32> to vector<8x4x16xf32>
    %83 = vector.shape_cast %82 : vector<8x4x16xf32> to vector<32x16xf32>
    %cst_22 = arith.constant dense<0.000000e+00> : vector<32xf32>
    %84 = vector.multi_reduction <add>, %83, %cst_22 [1] : vector<32x16xf32> to vector<32xf32>
    %85 = vector.shape_cast %84 : vector<32xf32> to vector<32x1xf32>
    %cst_23 = arith.constant 1.600000e+01 : f32
    %86 = vector.broadcast %cst_23 : f32 to vector<32x1xf32>
    %87 = arith.divf %85, %86 : vector<32x1xf32>
    %88 = vector.broadcast %87 : vector<32x1xf32> to vector<32x16xf32>
    %89 = arith.subf %83, %88 : vector<32x16xf32>
    %90 = arith.mulf %89, %89 : vector<32x16xf32>
    %cst_24 = arith.constant dense<0.000000e+00> : vector<32xf32>
    %91 = vector.multi_reduction <add>, %90, %cst_24 [1] : vector<32x16xf32> to vector<32xf32>
    %92 = vector.shape_cast %91 : vector<32xf32> to vector<32x1xf32>
    %cst_25 = arith.constant 1.600000e+01 : f32
    %93 = vector.broadcast %cst_25 : f32 to vector<32x1xf32>
    %94 = arith.divf %92, %93 : vector<32x1xf32>
    %95 = vector.broadcast %87 : vector<32x1xf32> to vector<32x16xf32>
    %96 = arith.subf %83, %95 : vector<32x16xf32>
    %cst_26 = arith.constant 9.99999997E-7 : f32
    %97 = vector.broadcast %cst_26 : f32 to vector<32x1xf32>
    %98 = arith.addf %94, %97 : vector<32x1xf32>
    %99 = math.rsqrt %98 : vector<32x1xf32>
    %100 = vector.broadcast %99 : vector<32x1xf32> to vector<32x16xf32>
    %101 = arith.mulf %96, %100 : vector<32x16xf32>
    %102 = arith.mulf %101, %4 : vector<32x16xf32>
    %103 = arith.addf %102, %7 : vector<32x16xf32>
    %104 = arith.addf %80, %103 : vector<32x16xf32>
    %105 = tpu.concatenate %31, %55, %79, %103 in 1 : vector<32x16xf32>, vector<32x16xf32>, vector<32x16xf32>, vector<32x16xf32> -> vector<32x64xf32>
    %cst_27 = arith.constant 2.500000e-01 : f32
    %106 = vector.broadcast %cst_27 : f32 to vector<32x16xf32>
    %107 = arith.mulf %104, %106 : vector<32x16xf32>
    %cst_28 = arith.constant 0.000000e+00 : f32
    %108 = vector.broadcast %cst_28 : f32 to vector<32x16xf32>
    %109 = vector.extract_strided_slice %1 {offsets = [0, 0, 0, 32], sizes = [8, 1, 4, 16], strides = [1, 1, 1, 1]} : vector<8x2x4x64xf32> to vector<8x1x4x16xf32>
    %110 = vector.shape_cast %109 : vector<8x1x4x16xf32> to vector<8x4x16xf32>
    %111 = vector.shape_cast %110 : vector<8x4x16xf32> to vector<32x16xf32>
    %cst_29 = arith.constant dense<0.000000e+00> : vector<32xf32>
    %112 = vector.multi_reduction <add>, %111, %cst_29 [1] : vector<32x16xf32> to vector<32xf32>
    %113 = vector.shape_cast %112 : vector<32xf32> to vector<32x1xf32>
    %cst_30 = arith.constant 1.600000e+01 : f32
    %114 = vector.broadcast %cst_30 : f32 to vector<32x1xf32>
    %115 = arith.divf %113, %114 : vector<32x1xf32>
    %116 = vector.broadcast %115 : vector<32x1xf32> to vector<32x16xf32>
    %117 = arith.subf %111, %116 : vector<32x16xf32>
    %118 = arith.mulf %117, %117 : vector<32x16xf32>
    %cst_31 = arith.constant dense<0.000000e+00> : vector<32xf32>
    %119 = vector.multi_reduction <add>, %118, %cst_31 [1] : vector<32x16xf32> to vector<32xf32>
    %120 = vector.shape_cast %119 : vector<32xf32> to vector<32x1xf32>
    %cst_32 = arith.constant 1.600000e+01 : f32
    %121 = vector.broadcast %cst_32 : f32 to vector<32x1xf32>
    %122 = arith.divf %120, %121 : vector<32x1xf32>
    %123 = vector.broadcast %115 : vector<32x1xf32> to vector<32x16xf32>
    %124 = arith.subf %111, %123 : vector<32x16xf32>
    %cst_33 = arith.constant 9.99999997E-7 : f32
    %125 = vector.broadcast %cst_33 : f32 to vector<32x1xf32>
    %126 = arith.addf %122, %125 : vector<32x1xf32>
    %127 = math.rsqrt %126 : vector<32x1xf32>
    %128 = vector.broadcast %127 : vector<32x1xf32> to vector<32x16xf32>
    %129 = arith.mulf %124, %128 : vector<32x16xf32>
    %130 = arith.mulf %129, %4 : vector<32x16xf32>
    %131 = arith.addf %130, %7 : vector<32x16xf32>
    %132 = arith.addf %108, %131 : vector<32x16xf32>
    %133 = vector.extract_strided_slice %1 {offsets = [0, 0, 0, 48], sizes = [8, 1, 4, 16], strides = [1, 1, 1, 1]} : vector<8x2x4x64xf32> to vector<8x1x4x16xf32>
    %134 = vector.shape_cast %133 : vector<8x1x4x16xf32> to vector<8x4x16xf32>
    %135 = vector.shape_cast %134 : vector<8x4x16xf32> to vector<32x16xf32>
    %cst_34 = arith.constant dense<0.000000e+00> : vector<32xf32>
    %136 = vector.multi_reduction <add>, %135, %cst_34 [1] : vector<32x16xf32> to vector<32xf32>
    %137 = vector.shape_cast %136 : vector<32xf32> to vector<32x1xf32>
    %cst_35 = arith.constant 1.600000e+01 : f32
    %138 = vector.broadcast %cst_35 : f32 to vector<32x1xf32>
    %139 = arith.divf %137, %138 : vector<32x1xf32>
    %140 = vector.broadcast %139 : vector<32x1xf32> to vector<32x16xf32>
    %141 = arith.subf %135, %140 : vector<32x16xf32>
    %142 = arith.mulf %141, %141 : vector<32x16xf32>
    %cst_36 = arith.constant dense<0.000000e+00> : vector<32xf32>
    %143 = vector.multi_reduction <add>, %142, %cst_36 [1] : vector<32x16xf32> to vector<32xf32>
    %144 = vector.shape_cast %143 : vector<32xf32> to vector<32x1xf32>
    %cst_37 = arith.constant 1.600000e+01 : f32
    %145 = vector.broadcast %cst_37 : f32 to vector<32x1xf32>
    %146 = arith.divf %144, %145 : vector<32x1xf32>
    %147 = vector.broadcast %139 : vector<32x1xf32> to vector<32x16xf32>
    %148 = arith.subf %135, %147 : vector<32x16xf32>
    %cst_38 = arith.constant 9.99999997E-7 : f32
    %149 = vector.broadcast %cst_38 : f32 to vector<32x1xf32>
    %150 = arith.addf %146, %149 : vector<32x1xf32>
    %151 = math.rsqrt %150 : vector<32x1xf32>
    %152 = vector.broadcast %151 : vector<32x1xf32> to vector<32x16xf32>
    %153 = arith.mulf %148, %152 : vector<32x16xf32>
    %154 = arith.mulf %153, %4 : vector<32x16xf32>
    %155 = arith.addf %154, %7 : vector<32x16xf32>
    %156 = arith.addf %132, %155 : vector<32x16xf32>
    %157 = vector.extract_strided_slice %1 {offsets = [0, 1, 0, 32], sizes = [8, 1, 4, 16], strides = [1, 1, 1, 1]} : vector<8x2x4x64xf32> to vector<8x1x4x16xf32>
    %158 = vector.shape_cast %157 : vector<8x1x4x16xf32> to vector<8x4x16xf32>
    %159 = vector.shape_cast %158 : vector<8x4x16xf32> to vector<32x16xf32>
    %cst_39 = arith.constant dense<0.000000e+00> : vector<32xf32>
    %160 = vector.multi_reduction <add>, %159, %cst_39 [1] : vector<32x16xf32> to vector<32xf32>
    %161 = vector.shape_cast %160 : vector<32xf32> to vector<32x1xf32>
    %cst_40 = arith.constant 1.600000e+01 : f32
    %162 = vector.broadcast %cst_40 : f32 to vector<32x1xf32>
    %163 = arith.divf %161, %162 : vector<32x1xf32>
    %164 = vector.broadcast %163 : vector<32x1xf32> to vector<32x16xf32>
    %165 = arith.subf %159, %164 : vector<32x16xf32>
    %166 = arith.mulf %165, %165 : vector<32x16xf32>
    %cst_41 = arith.constant dense<0.000000e+00> : vector<32xf32>
    %167 = vector.multi_reduction <add>, %166, %cst_41 [1] : vector<32x16xf32> to vector<32xf32>
    %168 = vector.shape_cast %167 : vector<32xf32> to vector<32x1xf32>
    %cst_42 = arith.constant 1.600000e+01 : f32
    %169 = vector.broadcast %cst_42 : f32 to vector<32x1xf32>
    %170 = arith.divf %168, %169 : vector<32x1xf32>
    %171 = vector.broadcast %163 : vector<32x1xf32> to vector<32x16xf32>
    %172 = arith.subf %159, %171 : vector<32x16xf32>
    %cst_43 = arith.constant 9.99999997E-7 : f32
    %173 = vector.broadcast %cst_43 : f32 to vector<32x1xf32>
    %174 = arith.addf %170, %173 : vector<32x1xf32>
    %175 = math.rsqrt %174 : vector<32x1xf32>
    %176 = vector.broadcast %175 : vector<32x1xf32> to vector<32x16xf32>
    %177 = arith.mulf %172, %176 : vector<32x16xf32>
    %178 = arith.mulf %177, %4 : vector<32x16xf32>
    %179 = arith.addf %178, %7 : vector<32x16xf32>
    %180 = arith.addf %156, %179 : vector<32x16xf32>
    %181 = vector.extract_strided_slice %1 {offsets = [0, 1, 0, 48], sizes = [8, 1, 4, 16], strides = [1, 1, 1, 1]} : vector<8x2x4x64xf32> to vector<8x1x4x16xf32>
    %182 = vector.shape_cast %181 : vector<8x1x4x16xf32> to vector<8x4x16xf32>
    %183 = vector.shape_cast %182 : vector<8x4x16xf32> to vector<32x16xf32>
    %cst_44 = arith.constant dense<0.000000e+00> : vector<32xf32>
    %184 = vector.multi_reduction <add>, %183, %cst_44 [1] : vector<32x16xf32> to vector<32xf32>
    %185 = vector.shape_cast %184 : vector<32xf32> to vector<32x1xf32>
    %cst_45 = arith.constant 1.600000e+01 : f32
    %186 = vector.broadcast %cst_45 : f32 to vector<32x1xf32>
    %187 = arith.divf %185, %186 : vector<32x1xf32>
    %188 = vector.broadcast %187 : vector<32x1xf32> to vector<32x16xf32>
    %189 = arith.subf %183, %188 : vector<32x16xf32>
    %190 = arith.mulf %189, %189 : vector<32x16xf32>
    %cst_46 = arith.constant dense<0.000000e+00> : vector<32xf32>
    %191 = vector.multi_reduction <add>, %190, %cst_46 [1] : vector<32x16xf32> to vector<32xf32>
    %192 = vector.shape_cast %191 : vector<32xf32> to vector<32x1xf32>
    %cst_47 = arith.constant 1.600000e+01 : f32
    %193 = vector.broadcast %cst_47 : f32 to vector<32x1xf32>
    %194 = arith.divf %192, %193 : vector<32x1xf32>
    %195 = vector.broadcast %187 : vector<32x1xf32> to vector<32x16xf32>
    %196 = arith.subf %183, %195 : vector<32x16xf32>
    %cst_48 = arith.constant 9.99999997E-7 : f32
    %197 = vector.broadcast %cst_48 : f32 to vector<32x1xf32>
    %198 = arith.addf %194, %197 : vector<32x1xf32>
    %199 = math.rsqrt %198 : vector<32x1xf32>
    %200 = vector.broadcast %199 : vector<32x1xf32> to vector<32x16xf32>
    %201 = arith.mulf %196, %200 : vector<32x16xf32>
    %202 = arith.mulf %201, %4 : vector<32x16xf32>
    %203 = arith.addf %202, %7 : vector<32x16xf32>
    %204 = arith.addf %180, %203 : vector<32x16xf32>
    %205 = tpu.concatenate %131, %155, %179, %203 in 1 : vector<32x16xf32>, vector<32x16xf32>, vector<32x16xf32>, vector<32x16xf32> -> vector<32x64xf32>
    %cst_49 = arith.constant 2.500000e-01 : f32
    %206 = vector.broadcast %cst_49 : f32 to vector<32x16xf32>
    %207 = arith.mulf %204, %206 : vector<32x16xf32>
    %208 = tpu.concatenate %105, %205 in 0 : vector<32x64xf32>, vector<32x64xf32> -> vector<64x64xf32>
    %209 = arith.truncf %208 : vector<64x64xf32> to vector<64x64xbf16>
    %c0_50 = arith.constant 0 : index
    %c0_51 = arith.constant 0 : index
    %210 = vector.load %arg4[%c0_50, %c0_51] : memref<64x64xbf16, #tpu.memory_space<vmem>>, vector<64x64xbf16>
    %cst_52 = arith.constant dense<0.000000e+00> : vector<64x64xf32>
    %211 = tpu.matmul %209, %210, %cst_52 {dimension_numbers = #tpu.dot_dimension_numbers<[1], [0], [0], [1], [0, 0, 1, 1], [], []>} : vector<64x64xbf16>, vector<64x64xbf16>, vector<64x64xf32> -> vector<64x64xf32>
    %c0_53 = arith.constant 0 : index
    %c0_54 = arith.constant 0 : index
    %212 = vector.load %arg5[%c0_53, %c0_54] : memref<6x128xf32, #tpu.memory_space<vmem>>, vector<1x64xf32>
    %213 = vector.broadcast %212 : vector<1x64xf32> to vector<64x64xf32>
    %214 = arith.addf %211, %213 : vector<64x64xf32>
    %cst_55 = arith.constant dense<0.000000e+00> : vector<64xf32>
    %215 = vector.multi_reduction <add>, %214, %cst_55 [1] : vector<64x64xf32> to vector<64xf32>
    %216 = vector.shape_cast %215 : vector<64xf32> to vector<64x1xf32>
    %cst_56 = arith.constant 6.400000e+01 : f32
    %217 = vector.broadcast %cst_56 : f32 to vector<64x1xf32>
    %218 = arith.divf %216, %217 : vector<64x1xf32>
    %219 = vector.broadcast %218 : vector<64x1xf32> to vector<64x64xf32>
    %220 = arith.subf %214, %219 : vector<64x64xf32>
    %221 = arith.mulf %220, %220 : vector<64x64xf32>
    %cst_57 = arith.constant dense<0.000000e+00> : vector<64xf32>
    %222 = vector.multi_reduction <add>, %221, %cst_57 [1] : vector<64x64xf32> to vector<64xf32>
    %223 = vector.shape_cast %222 : vector<64xf32> to vector<64x1xf32>
    %cst_58 = arith.constant 6.400000e+01 : f32
    %224 = vector.broadcast %cst_58 : f32 to vector<64x1xf32>
    %225 = arith.divf %223, %224 : vector<64x1xf32>
    %226 = vector.broadcast %218 : vector<64x1xf32> to vector<64x64xf32>
    %227 = arith.subf %214, %226 : vector<64x64xf32>
    %cst_59 = arith.constant 9.99999997E-7 : f32
    %228 = vector.broadcast %cst_59 : f32 to vector<64x1xf32>
    %229 = arith.addf %225, %228 : vector<64x1xf32>
    %230 = math.rsqrt %229 : vector<64x1xf32>
    %231 = vector.broadcast %230 : vector<64x1xf32> to vector<64x64xf32>
    %232 = arith.mulf %227, %231 : vector<64x64xf32>
    %233 = vector.extract_strided_slice %232 {offsets = [0, 0], sizes = [32, 64], strides = [1, 1]} : vector<64x64xf32> to vector<32x64xf32>
    %234 = vector.extract_strided_slice %232 {offsets = [32, 0], sizes = [32, 64], strides = [1, 1]} : vector<64x64xf32> to vector<32x64xf32>
    %235 = tpu.concatenate %233, %234 in 1 : vector<32x64xf32>, vector<32x64xf32> -> vector<32x128xf32>
    %236 = tpu.concatenate %107, %107, %107, %107, %207, %207, %207, %207 in 1 : vector<32x16xf32>, vector<32x16xf32>, vector<32x16xf32>, vector<32x16xf32>, vector<32x16xf32>, vector<32x16xf32>, vector<32x16xf32>, vector<32x16xf32> -> vector<32x128xf32>
    %c1_60 = arith.constant 1 : index
    %c0_61 = arith.constant 0 : index
    %237 = vector.load %arg5[%c1_60, %c0_61] : memref<6x128xf32, #tpu.memory_space<vmem>>, vector<1x128xf32>
    %238 = vector.broadcast %237 : vector<1x128xf32> to vector<32x128xf32>
    %239 = arith.mulf %235, %238 : vector<32x128xf32>
    %c2 = arith.constant 2 : index
    %c0_62 = arith.constant 0 : index
    %240 = vector.load %arg5[%c2, %c0_62] : memref<6x128xf32, #tpu.memory_space<vmem>>, vector<1x128xf32>
    %241 = vector.broadcast %240 : vector<1x128xf32> to vector<32x128xf32>
    %242 = arith.addf %239, %241 : vector<32x128xf32>
    %243 = arith.addf %242, %236 : vector<32x128xf32>
    %c3 = arith.constant 3 : index
    %c0_63 = arith.constant 0 : index
    %244 = vector.load %arg5[%c3, %c0_63] : memref<6x128xf32, #tpu.memory_space<vmem>>, vector<1x128xf32>
    %245 = vector.broadcast %244 : vector<1x128xf32> to vector<32x128xf32>
    %246 = arith.subf %243, %245 : vector<32x128xf32>
    %cst_64 = arith.constant 0.000000e+00 : f32
    %247 = vector.broadcast %cst_64 : f32 to vector<32x128xf32>
    %248 = arith.cmpf oge, %246, %247 : vector<32x128xf32>
    %c4 = arith.constant 4 : index
    %c0_65 = arith.constant 0 : index
    %249 = vector.load %arg5[%c4, %c0_65] : memref<6x128xf32, #tpu.memory_space<vmem>>, vector<1x128xf32>
    %250 = vector.broadcast %249 : vector<1x128xf32> to vector<32x128xf32>
    %251 = arith.mulf %250, %246 : vector<32x128xf32>
    %252 = arith.select %248, %246, %251 : vector<32x128xi1>, vector<32x128xf32>
    %c5 = arith.constant 5 : index
    %c0_66 = arith.constant 0 : index
    %253 = vector.load %arg5[%c5, %c0_66] : memref<6x128xf32, #tpu.memory_space<vmem>>, vector<1x128xf32>
    %254 = vector.broadcast %253 : vector<1x128xf32> to vector<32x128xf32>
    %255 = arith.addf %252, %254 : vector<32x128xf32>
    %c0_67 = arith.constant 0 : index
    %c0_68 = arith.constant 0 : index
    %c0_69 = arith.constant 0 : index
    %256 = vector.load %arg6[%c0_67, %c0_68, %c0_69] : memref<1x32x128xf32, #tpu.memory_space<vmem>>, vector<1x32x128xf32>
    %257 = vector.shape_cast %256 : vector<1x32x128xf32> to vector<32x128xf32>
    %258 = arith.addf %255, %257 : vector<32x128xf32>
    %c0_70 = arith.constant 0 : index
    %c0_71 = arith.constant 0 : index
    %c0_72 = arith.constant 0 : index
    %259 = vector.load %arg7[%c0_70, %c0_71, %c0_72] : memref<1x32x128xf32, #tpu.memory_space<vmem>>, vector<1x32x128xf32>
    %260 = vector.shape_cast %259 : vector<1x32x128xf32> to vector<32x128xf32>
    %261 = vector.shape_cast %258 : vector<32x128xf32> to vector<1x32x128xf32>
    tpu.vector_store %arg7[%c0_70, %c0_71, %c0_72], %261 {strides = array<i32>} : memref<1x32x128xf32, #tpu.memory_space<vmem>>, vector<1x32x128xf32>,
    return
  }
  func.func @transform_0(%arg0: i32, %arg1: i32) -> (i32, i32, i32, i32, i32) {
    %c0_i32 = arith.constant 0 : i32
    %c0_i32_0 = arith.constant 0 : i32
    %c0_i32_1 = arith.constant 0 : i32
    %c0_i32_2 = arith.constant 0 : i32
    return %arg1, %arg0, %c0_i32, %c0_i32_0, %c0_i32_1 : i32, i32, i32, i32, i32
  }
  func.func @transform_1(%arg0: i32, %arg1: i32) -> (i32, i32) {
    %c0_i32 = arith.constant 0 : i32
    %c0_i32_0 = arith.constant 0 : i32
    %c0_i32_1 = arith.constant 0 : i32
    return %c0_i32, %c0_i32_0 : i32, i32
  }
  func.func @transform_2(%arg0: i32, %arg1: i32) -> (i32, i32) {
    %c0_i32 = arith.constant 0 : i32
    %c0_i32_0 = arith.constant 0 : i32
    %c0_i32_1 = arith.constant 0 : i32
    return %c0_i32, %c0_i32_0 : i32, i32
  }
  func.func @transform_3(%arg0: i32, %arg1: i32) -> (i32, i32) {
    %c0_i32 = arith.constant 0 : i32
    %c0_i32_0 = arith.constant 0 : i32
    %c0_i32_1 = arith.constant 0 : i32
    return %c0_i32, %c0_i32_0 : i32, i32
  }
  func.func @transform_4(%arg0: i32, %arg1: i32) -> (i32, i32, i32) {
    %c0_i32 = arith.constant 0 : i32
    %c0_i32_0 = arith.constant 0 : i32
    %c0_i32_1 = arith.constant 0 : i32
    return %c0_i32, %arg0, %c0_i32_0 : i32, i32, i32
  }
  func.func @transform_5(%arg0: i32, %arg1: i32) -> (i32, i32, i32) {
    %c0_i32 = arith.constant 0 : i32
    %c0_i32_0 = arith.constant 0 : i32
    return %arg1, %arg0, %c0_i32 : i32, i32, i32
  }
}

</mosaic_0001>

<llo_original>
// kernel: tpu_custom_call.1
$region0: #{tpu_custom_call.1}
  #allocation0 [shape = 'u32[]', space=smem, size = 0x4, offset = 0x4, fixed_abs, tag = 'smem constant byte address 0x4 - core index']
  #allocation1 [shape = 'u32[144,128]{1,0:T(1,128)}', space=vmem, size = 0x12000, scoped, tag = 'internal scratch']
  %s0 = inlined_call_operand.hbm [shape: f32[2,8,2,4,64], index: 0, kind: input, shape index: {}]
  %s1 = inlined_call_operand.vmem [shape: f32[2,16], index: 1, kind: input, shape index: {}]
  %s2 = inlined_call_operand.hbm [shape: bf16[64,64], index: 2, kind: input, shape index: {}]
  %s3 = inlined_call_operand.vmem [shape: f32[6,128], index: 3, kind: input, shape index: {}]
  %s4 = inlined_call_operand.hbm [shape: f32[1,32,128], index: 4, kind: input, shape index: {}]
  %s5 = inlined_call_operand.hbm [shape: f32[2,32,128], index: 5, kind: output, shape index: {}]
  %s6 = sld [smem:[#allocation0]]
  $region65: #{tpu_custom_call.1} parent=0
    _
  %s8 = ssub.s32 1, %s6
  %s9 = scalar_select 0, %s8, %s6
  $region1: #{tpu_custom_call.1} parent=0
    #allocation2 [shape = 'u8[65536]{0}', space=vmem, size = 0x10000, scoped, tag = 'input window, operand 0']
    #allocation3 [shape = 's32[2]{0}', space=sflag, size = 0x8, scoped, tag = 'scoped memory for tpu_custom_call.1']
    #allocation4 [shape = 's32[2]{0}', space=sflag, size = 0x8, scoped, tag = 'scoped memory for tpu_custom_call.1']
    #allocation5 [shape = 'u8[16384]{0}', space=vmem, size = 0x4000, scoped, tag = 'input window, operand 2, single buffered']
    #allocation6 [shape = 's32[1]{0}', space=sflag, size = 0x4, scoped, tag = 'scoped memory for tpu_custom_call.1']
    #allocation7 [shape = 'u8[16384]{0}', space=vmem, size = 0x4000, scoped, tag = 'input window, operand 4, single buffered']
    #allocation8 [shape = 'u8[32768]{0}', space=vmem, size = 0x8000, scoped, tag = 'output window, operand 0']
    %10 = vsyncpa [#allocation3], 0
    %s11 = scalar_lea.sflag [#allocation3], 1
    %12 = vsyncpa %s11, 0
    %13 = vsyncpa [#allocation6], 0
    %14 = vsyncpa [#allocation4], 0
    %s15 = scalar_lea.sflag [#allocation4], 1
    %16 = vsyncpa %s15, 0
    loop: start=0, step=1, limit=4
    $region2: #{tpu_custom_call.1} parent=1 // loop_pre_header
      _
    $region3: #{tpu_custom_call.1} parent=1 // loop_header
      %s18 = sphi 0, %s22
      %p19 = scmp.ge.s32.totalorder %s18, 4
      %s25 = sphi 0, %s37
      %s26 = sphi 0, %s33
      %s27 = sphi 0, %s25
      %s28 = sphi 0, %s26
      %s29 = sphi 0, %s27
      %s30 = sphi 0, %s28
      %s42 = sphi 0, %s44
      %s45 = sphi 0, %s42
      %s46 = sphi 0, %s45
      %s62 = sphi 0, %s46
      %s66 = sphi 0, %s66
      %s68 = sphi 0, %s66
      %s69 = sphi 0, %s68
      %s83 = sphi 0, %s69
      %s87 = sphi 0, %s87
      %s89 = sphi 0, %s87
      %s90 = sphi 0, %s89
      %s104 = sphi 0, %s90
      %s108 = sphi 0, %s108
      %s110 = sphi 0, %s108
      %s111 = sphi 0, %s110
      %s125 = sphi 0, %s111
      %s131 = sphi 0, %s133
      %s134 = sphi 0, %s131
      %s135 = sphi 0, %s134
      %s151 = sphi 0, %s135
      %s159 = sphi 0, %s161
      %s162 = sphi 0, %s159
      %s163 = sphi 0, %s162
      %s179 = sphi 0, %s163
    $region4: #{tpu_custom_call.1} parent=1 // loop_header_branch
      %21 = sbr.rel (%p19) target = $region8
    $region5: #{tpu_custom_call.1} parent=1 // loop_body
      %s23 = ssub.s32 %s18, 1
      %s24 = ssub.s32 %s18, 2
      %s31 = sadd.s32 1, %s26
      %p32 = scmp.ge.s32.totalorder %s31, 2
      %s33 = scalar_select %p32, 0, %s31
      %s34 = sadd.s32 1, %s25
      %s35 = scalar_select %p32, %s34, %s25
      %p36 = scmp.ge.s32.totalorder %s35, 1
      %s37 = scalar_select %p36, 0, %s35
      %s38 = ssub.s32 %s26, %s33
      %s39 = ssub.s32 %s25, %s37
      %s40 = sor.u32 %s38, %s39
      %p41 = scmp.eq.s32.totalorder %s40, 0
      %s43 = sadd.s32 %s42, 1
      %s44 = scalar_select %p41, %s42, %s43
      %p47 = pneg %p41
      %p48 = scmp.eq.s32.totalorder %s18, 1
      %p49 = por %p47, %p48
      %p50 = scmp.ne.s32.totalorder %s42, %s45
      %p51 = scmp.eq.s32.totalorder %s18, 0
      %p52 = por %p50, %p51
      %p53 = scmp.ne.s32.totalorder %s42, %s45
      %p54 = scmp.eq.s32.totalorder %s23, 1
      %p55 = por %p53, %p54
      %p56 = scmp.ne.s32.totalorder %s45, %s46
      %p57 = scmp.eq.s32.totalorder %s23, 0
      %p58 = por %p56, %p57
      %p59 = scmp.ne.s32.totalorder %s45, %s46
      %p60 = scmp.eq.s32.totalorder %s24, 1
      %p61 = por %p59, %p60
      %p63 = scmp.ne.s32.totalorder %s46, %s62
      %p64 = scmp.eq.s32.totalorder %s24, 0
      %p65 = por %p63, %p64
      %s67 = sadd.s32 %s66, 1
      %p70 = scmp.eq.s32.totalorder %s18, 1
      %p71 = scmp.ne.s32.totalorder %s66, %s68
      %p72 = scmp.eq.s32.totalorder %s18, 0
      %p73 = por %p71, %p72
      %p74 = scmp.ne.s32.totalorder %s66, %s68
      %p75 = scmp.eq.s32.totalorder %s23, 1
      %p76 = por %p74, %p75
      %p77 = scmp.ne.s32.totalorder %s68, %s69
      %p78 = scmp.eq.s32.totalorder %s23, 0
      %p79 = por %p77, %p78
      %p80 = scmp.ne.s32.totalorder %s68, %s69
      %p81 = scmp.eq.s32.totalorder %s24, 1
      %p82 = por %p80, %p81
      %p84 = scmp.ne.s32.totalorder %s69, %s83
      %p85 = scmp.eq.s32.totalorder %s24, 0
      %p86 = por %p84, %p85
      %s88 = sadd.s32 %s87, 1
      %p91 = scmp.eq.s32.totalorder %s18, 1
      %p92 = scmp.ne.s32.totalorder %s87, %s89
      %p93 = scmp.eq.s32.totalorder %s18, 0
      %p94 = por %p92, %p93
      %p95 = scmp.ne.s32.totalorder %s87, %s89
      %p96 = scmp.eq.s32.totalorder %s23, 1
      %p97 = por %p95, %p96
      %p98 = scmp.ne.s32.totalorder %s89, %s90
      %p99 = scmp.eq.s32.totalorder %s23, 0
      %p100 = por %p98, %p99
      %p101 = scmp.ne.s32.totalorder %s89, %s90
      %p102 = scmp.eq.s32.totalorder %s24, 1
      %p103 = por %p101, %p102
      %p105 = scmp.ne.s32.totalorder %s90, %s104
      %p106 = scmp.eq.s32.totalorder %s24, 0
      %p107 = por %p105, %p106
      %s109 = sadd.s32 %s108, 1
      %p112 = scmp.eq.s32.totalorder %s18, 1
      %p113 = scmp.ne.s32.totalorder %s108, %s110
      %p114 = scmp.eq.s32.totalorder %s18, 0
      %p115 = por %p113, %p114
      %p116 = scmp.ne.s32.totalorder %s108, %s110
      %p117 = scmp.eq.s32.totalorder %s23, 1
      %p118 = por %p116, %p117
      %p119 = scmp.ne.s32.totalorder %s110, %s111
      %p120 = scmp.eq.s32.totalorder %s23, 0
      %p121 = por %p119, %p120
      %p122 = scmp.ne.s32.totalorder %s110, %s111
      %p123 = scmp.eq.s32.totalorder %s24, 1
      %p124 = por %p122, %p123
      %p126 = scmp.ne.s32.totalorder %s111, %s125
      %p127 = scmp.eq.s32.totalorder %s24, 0
      %p128 = por %p126, %p127
      %s129 = ssub.s32 %s25, %s37
      %p130 = scmp.eq.s32.totalorder %s129, 0
      %s132 = sadd.s32 %s131, 1
      %s133 = scalar_select %p130, %s131, %s132
      %p136 = pneg %p130
      %p137 = scmp.eq.s32.totalorder %s18, 1
      %p138 = por %p136, %p137
      %p139 = scmp.ne.s32.totalorder %s131, %s134
      %p140 = scmp.eq.s32.totalorder %s18, 0
      %p141 = por %p139, %p140
      %p142 = scmp.ne.s32.totalorder %s131, %s134
      %p143 = scmp.eq.s32.totalorder %s23, 1
      %p144 = por %p142, %p143
      %p145 = scmp.ne.s32.totalorder %s134, %s135
      %p146 = scmp.eq.s32.totalorder %s23, 0
      %p147 = por %p145, %p146
      %p148 = scmp.ne.s32.totalorder %s134, %s135
      %p149 = scmp.eq.s32.totalorder %s24, 1
      %p150 = por %p148, %p149
      %p152 = scmp.ne.s32.totalorder %s135, %s151
      %p153 = scmp.eq.s32.totalorder %s24, 0
      %p154 = por %p152, %p153
      %s155 = ssub.s32 %s26, %s33
      %s156 = ssub.s32 %s25, %s37
      %s157 = sor.u32 %s155, %s156
      %p158 = scmp.eq.s32.totalorder %s157, 0
      %s160 = sadd.s32 %s159, 1
      %s161 = scalar_select %p158, %s159, %s160
      %p164 = pneg %p158
      %p165 = scmp.eq.s32.totalorder %s18, 1
      %p166 = por %p164, %p165
      %p167 = scmp.ne.s32.totalorder %s159, %s162
      %p168 = scmp.eq.s32.totalorder %s18, 0
      %p169 = por %p167, %p168
      %p170 = scmp.ne.s32.totalorder %s159, %s162
      %p171 = scmp.eq.s32.totalorder %s23, 1
      %p172 = por %p170, %p171
      %p173 = scmp.ne.s32.totalorder %s162, %s163
      %p174 = scmp.eq.s32.totalorder %s23, 0
      %p175 = por %p173, %p174
      %p176 = scmp.ne.s32.totalorder %s162, %s163
      %p177 = scmp.eq.s32.totalorder %s24, 1
      %p178 = por %p176, %p177
      %p180 = scmp.ne.s32.totalorder %s163, %s179
      %p181 = scmp.eq.s32.totalorder %s24, 0
      %p182 = por %p180, %p181
      %p183 = scmp.le.s32.totalorder 1, %s18
      %p184 = scmp.lt.s32.totalorder %s18, 3
      %p185 = pnand %p183, %p184
      %p186 = pneg %p185
      // Predicated region
      $region9: #{tpu_custom_call.1} parent=5 // pred_check
        _
      $region10: #{tpu_custom_call.1} parent=5 // pred_check_branch
        %188 = sbr.rel (%p185) target = $region12
      $region11: #{tpu_custom_call.1} parent=5 // pred_region
        %s189 = ssub.s32 %s18, 1
        // Predicated region
        $region13: #{tpu_custom_call.1} parent=11 // pred_check
          %p190 = pneg %p79
        $region14: #{tpu_custom_call.1} parent=11 // pred_check_branch
          %192 = sbr.rel (%p190) target = $region16
        $region15: #{tpu_custom_call.1} parent=11 // pred_region
          _
        $region16: #{tpu_custom_call.1} parent=11 // pred_fallthru
          _
        // Predicated region
        $region17: #{tpu_custom_call.1} parent=11 // pred_check
          %p193 = pneg %p100
        $region18: #{tpu_custom_call.1} parent=11 // pred_check_branch
          %195 = sbr.rel (%p193) target = $region20
        $region19: #{tpu_custom_call.1} parent=11 // pred_region
          %s197 = ssub.s32 512, 512
          %198 = vsyncadd [#allocation6], %s197
          %s199 = sshll.u32 [#allocation5], 4
          %s200 = int_to_ptr.vmem [resolvable:$true] %s199
          %205 = dma.hbm_to_vmem [thread:$0]  %s2, 512, %s200, [#allocation6], 64, 64, 4
        $region20: #{tpu_custom_call.1} parent=11 // pred_fallthru
          _
        // Predicated region
        $region21: #{tpu_custom_call.1} parent=11 // pred_check
          %p206 = pneg %p121
        $region22: #{tpu_custom_call.1} parent=11 // pred_check_branch
          %208 = sbr.rel (%p206) target = $region24
        $region23: #{tpu_custom_call.1} parent=11 // pred_region
          _
        $region24: #{tpu_custom_call.1} parent=11 // pred_fallthru
          _
        // Predicated region
        $region25: #{tpu_custom_call.1} parent=11 // pred_check
          %p209 = pneg %p147
        $region26: #{tpu_custom_call.1} parent=11 // pred_check_branch
          %211 = sbr.rel (%p209) target = $region28
        $region27: #{tpu_custom_call.1} parent=11 // pred_region
          %s212 = smul.u32 4, %s27
          %s214 = ssub.s32 512, 512
          %215 = vsyncadd [#allocation6], %s214
          %s216 = smul.addr %s212, 128
          %s217 = scalar_lea.hbm %s4, %s216
          %s218 = sshll.u32 [#allocation7], 4
          %s219 = int_to_ptr.vmem [resolvable:$true] %s218
          %224 = dma.hbm_to_vmem [thread:$0]  %s217, 512, %s219, [#allocation6], 128, 128, 8
        $region28: #{tpu_custom_call.1} parent=11 // pred_fallthru
          _
      $region12: #{tpu_custom_call.1} parent=5 // pred_fallthru
        _
      %p225 = scmp.lt.s32.totalorder %s18, 2
      // Predicated region
      $region29: #{tpu_custom_call.1} parent=5 // pred_check
        %p226 = pneg %p225
      $region30: #{tpu_custom_call.1} parent=5 // pred_check_branch
        %228 = sbr.rel (%p226) target = $region32
      $region31: #{tpu_custom_call.1} parent=5 // pred_region
        // Predicated region
        $region33: #{tpu_custom_call.1} parent=31 // pred_check
          %p229 = pneg %p52
        $region34: #{tpu_custom_call.1} parent=31 // pred_check_branch
          %231 = sbr.rel (%p229) target = $region36
        $region35: #{tpu_custom_call.1} parent=31 // pred_region
          %s232 = sand.u32 %s42, 1
          %s233 = scalar_lea.sflag [#allocation3], %s232
          %s234 = sand.u32 %s42, 1
          %s235 = smul.addr %s234, 64
          %s236 = scalar_lea.vmem [#allocation2], %s235
          %s237 = smul.u32 8, %s25
          %s239 = ssub.s32 1024, 1024
          %240 = vsyncadd %s233, %s239
          %s241 = smul.addr %s237, 2
          %s242 = smul.addr %s26, 16
          %s243 = sadd.s32 %s241, %s242
          %s244 = smul.addr %s243, 64
          %s245 = scalar_lea.hbm %s0, %s244
          %s246 = sshll.u32 %s236, 4
          %s247 = int_to_ptr.vmem [resolvable:$true] %s246
          %252 = dma.hbm_to_vmem [thread:$0]  %s245, 1024, %s247, %s233, 64, 64, 4
        $region36: #{tpu_custom_call.1} parent=31 // pred_fallthru
          _
      $region32: #{tpu_custom_call.1} parent=5 // pred_fallthru
        _
      %p253 = scmp.le.s32.totalorder 1, %s18
      %p254 = scmp.lt.s32.totalorder %s18, 3
      %p255 = pnand %p253, %p254
      %p256 = pneg %p255
      // Predicated region
      $region37: #{tpu_custom_call.1} parent=5 // pred_check
        _
      $region38: #{tpu_custom_call.1} parent=5 // pred_check_branch
        %258 = sbr.rel (%p255) target = $region40
      $region39: #{tpu_custom_call.1} parent=5 // pred_region
        %s259 = ssub.s32 %s18, 1
        %s260 = sand.u32 %s45, 1
        %s261 = scalar_lea.sflag [#allocation3], %s260
        %s262 = sand.u32 %s45, 1
        %s263 = smul.addr %s262, 64
        %s264 = scalar_lea.vmem [#allocation2], %s263
        // Predicated region
        $region41: #{tpu_custom_call.1} parent=39 // pred_check
          %p265 = pneg %p58
        $region42: #{tpu_custom_call.1} parent=39 // pred_check_branch
          %267 = sbr.rel (%p265) target = $region44
        $region43: #{tpu_custom_call.1} parent=39 // pred_region
          %268 = dma.done %s261, 1024
        $region44: #{tpu_custom_call.1} parent=39 // pred_fallthru
          _
        // Predicated region
        $region45: #{tpu_custom_call.1} parent=39 // pred_check
          %p269 = pneg %p100
        $region46: #{tpu_custom_call.1} parent=39 // pred_check_branch
          %271 = sbr.rel (%p269) target = $region48
        $region47: #{tpu_custom_call.1} parent=39 // pred_region
          %272 = dma.done [#allocation6], 512
        $region48: #{tpu_custom_call.1} parent=39 // pred_fallthru
          _
        // Predicated region
        $region49: #{tpu_custom_call.1} parent=39 // pred_check
          %p273 = pneg %p147
        $region50: #{tpu_custom_call.1} parent=39 // pred_check_branch
          %275 = sbr.rel (%p273) target = $region52
        $region51: #{tpu_custom_call.1} parent=39 // pred_region
          %276 = dma.done [#allocation6], 512
        $region52: #{tpu_custom_call.1} parent=39 // pred_fallthru
          _
        %s277 = sand.u32 %s45, 1
        %s278 = scalar_lea.sflag [#allocation3], %s277
        %s279 = sand.u32 %s45, 1
        %s280 = smul.addr %s279, 64
        %s281 = scalar_lea.vmem [#allocation2], %s280
        %p282 = pneg %p58
        %p283 = pneg %p55
        %p284 = pneg %p79
        %p285 = pneg %p76
        %p286 = pneg %p100
        %p287 = pneg %p97
        %p288 = pneg %p121
        %p289 = pneg %p118
        %p290 = pneg %p147
        %p291 = pneg %p144
        %p292 = pneg %p175
        %p293 = pneg %p172
        %s294 = sand.u32 %s162, 1
        %s295 = scalar_lea.sflag [#allocation4], %s294
        %s296 = sand.u32 %s162, 1
        %s297 = smul.addr %s296, 32
        %s298 = scalar_lea.vmem [#allocation8], %s297
        %s299 = smul.u32 8, %s27
        %s300 = smul.u32 4, %s27
        %s301 = smul.u32 4, %s27
        %v303 = vld [vmem:[%s264] sm:$0xf]
        %v304 = vld [vmem:[%s264 + $0x4] sm:$0xf]
        %v305 = vld [vmem:[%s264 + $0x8] sm:$0xf]
        %v306 = vld [vmem:[%s264 + $0xc] sm:$0xf]
        %v307 = vld [vmem:[%s264 + $0x10] sm:$0xf]
        %v308 = vld [vmem:[%s264 + $0x14] sm:$0xf]
        %v309 = vld [vmem:[%s264 + $0x18] sm:$0xf]
        %v310 = vld [vmem:[%s264 + $0x1c] sm:$0xf]
        %v311 = vld [vmem:[%s264 + $0x20] sm:$0xf]
        %v312 = vld [vmem:[%s264 + $0x24] sm:$0xf]
        %v313 = vld [vmem:[%s264 + $0x28] sm:$0xf]
        %v314 = vld [vmem:[%s264 + $0x2c] sm:$0xf]
        %v315 = vld [vmem:[%s264 + $0x30] sm:$0xf]
        %v316 = vld [vmem:[%s264 + $0x34] sm:$0xf]
        %v317 = vld [vmem:[%s264 + $0x38] sm:$0xf]
        %v318 = vld [vmem:[%s264 + $0x3c] sm:$0xf]
        %v319 = vld [vmem:[%s1] sm:$0x1]
        %v320 = vlaneseq
        %v321 = vshrl.u32 %v320, 7
        %v322 = vsub.s32 0, %v321
        %v323 = vrot.slane %v319, %v322
        %v324 = vld [vmem:[%s1 + $0x1] sm:$0x1]
        %v325 = vlaneseq
        %v326 = vshrl.u32 %v325, 7
        %v327 = vsub.s32 0, %v326
        %v328 = vrot.slane %v324, %v327
        %v337 = vcombine.low %v303, %v305
        %v338 = vcombine.low %v307, %v309
        %v339 = vcombine.low %v311, %v313
        %v340 = vcombine.low %v315, %v317
        %vm345 = vcmask 130048
        %v346 = vsel %vm345, %v337, 0.0
        %347 = vadd.xlane.f32.xlu0 %v346
        %v348 = vpop.xlane.xlu0 %347
        %v349 = vsel %vm345, %v338, 0.0
        %350 = vadd.xlane.f32.xlu0 %v349
        %v351 = vpop.xlane.xlu0 %350
        %v352 = vsel %vm345, %v339, 0.0
        %353 = vadd.xlane.f32.xlu0 %v352
        %v354 = vpop.xlane.xlu0 %353
        %v355 = vsel %vm345, %v340, 0.0
        %356 = vadd.xlane.f32.xlu0 %v355
        %v357 = vpop.xlane.xlu0 %356
        %v358 = vrcp.pop 16.0
        %v359 = vmul.f32 %v348, %v358
        %v360 = vmul.f32 %v351, %v358
        %v361 = vmul.f32 %v354, %v358
        %v362 = vmul.f32 %v357, %v358
        %v368 = vunpack.c.l.s4 839922192
        %v369 = vunpack.c.0.s8 %v368
        %v370 = vlaneseq
        %v371 = vshrl.u32 %v370, 7
        %v372 = vsub.s32 %v369, %v371
        %v373 = vrot.slane %v359, %v372
        %v375 = vunpack.c.l.s4 1985246804
        %v376 = vunpack.c.0.s8 %v375
        %v377 = vlaneseq
        %v378 = vshrl.u32 %v377, 7
        %v379 = vsub.s32 %v376, %v378
        %v380 = vrot.slane %v359, %v379
        %v382 = vunpack.c.l.s4 839922192
        %v383 = vunpack.c.0.s8 %v382
        %v384 = vlaneseq
        %v385 = vshrl.u32 %v384, 7
        %v386 = vsub.s32 %v383, %v385
        %v387 = vrot.slane %v360, %v386
        %v389 = vunpack.c.l.s4 1985246804
        %v390 = vunpack.c.0.s8 %v389
        %v391 = vlaneseq
        %v392 = vshrl.u32 %v391, 7
        %v393 = vsub.s32 %v390, %v392
        %v394 = vrot.slane %v360, %v393
        %v396 = vunpack.c.l.s4 839922192
        %v397 = vunpack.c.0.s8 %v396
        %v398 = vlaneseq
        %v399 = vshrl.u32 %v398, 7
        %v400 = vsub.s32 %v397, %v399
        %v401 = vrot.slane %v361, %v400
        %v403 = vunpack.c.l.s4 1985246804
        %v404 = vunpack.c.0.s8 %v403
        %v405 = vlaneseq
        %v406 = vshrl.u32 %v405, 7
        %v407 = vsub.s32 %v404, %v406
        %v408 = vrot.slane %v361, %v407
        %v410 = vunpack.c.l.s4 839922192
        %v411 = vunpack.c.0.s8 %v410
        %v412 = vlaneseq
        %v413 = vshrl.u32 %v412, 7
        %v414 = vsub.s32 %v411, %v413
        %v415 = vrot.slane %v362, %v414
        %v417 = vunpack.c.l.s4 1985246804
        %v418 = vunpack.c.0.s8 %v417
        %v419 = vlaneseq
        %v420 = vshrl.u32 %v419, 7
        %v421 = vsub.s32 %v418, %v420
        %v422 = vrot.slane %v362, %v421
        %v431 = vsub.f32 %v303, %v373
        %v432 = vsub.f32 %v305, %v380
        %v433 = vsub.f32 %v307, %v387
        %v434 = vsub.f32 %v309, %v394
        %v435 = vsub.f32 %v311, %v401
        %v436 = vsub.f32 %v313, %v408
        %v437 = vsub.f32 %v315, %v415
        %v438 = vsub.f32 %v317, %v422
        %v439 = vmul.f32 %v431, %v431
        %v440 = vmul.f32 %v432, %v432
        %v441 = vmul.f32 %v433, %v433
        %v442 = vmul.f32 %v434, %v434
        %v443 = vmul.f32 %v435, %v435
        %v444 = vmul.f32 %v436, %v436
        %v445 = vmul.f32 %v437, %v437
        %v446 = vmul.f32 %v438, %v438
        %v455 = vcombine.low %v439, %v440
        %v456 = vcombine.low %v441, %v442
        %v457 = vcombine.low %v443, %v444
        %v458 = vcombine.low %v445, %v446
        %v463 = vsel %vm345, %v455, 0.0
        %464 = vadd.xlane.f32.xlu0 %v463
        %v465 = vpop.xlane.xlu0 %464
        %v466 = vsel %vm345, %v456, 0.0
        %467 = vadd.xlane.f32.xlu0 %v466
        %v468 = vpop.xlane.xlu0 %467
        %v469 = vsel %vm345, %v457, 0.0
        %470 = vadd.xlane.f32.xlu0 %v469
        %v471 = vpop.xlane.xlu0 %470
        %v472 = vsel %vm345, %v458, 0.0
        %473 = vadd.xlane.f32.xlu0 %v472
        %v474 = vpop.xlane.xlu0 %473
        %v475 = vmul.f32 %v465, %v358
        %v476 = vmul.f32 %v468, %v358
        %v477 = vmul.f32 %v471, %v358
        %v478 = vmul.f32 %v474, %v358
        %v479 = vadd.f32 %v475, 1e-06
        %v480 = vadd.f32 %v476, 1e-06
        %v481 = vadd.f32 %v477, 1e-06
        %v482 = vadd.f32 %v478, 1e-06
        %v483 = vrsqrt.pop %v479
        %v484 = vrsqrt.pop %v480
        %v485 = vrsqrt.pop %v481
        %v486 = vrsqrt.pop %v482
        %v492 = vunpack.c.l.s4 839922192
        %v493 = vunpack.c.0.s8 %v492
        %v494 = vlaneseq
        %v495 = vshrl.u32 %v494, 7
        %v496 = vsub.s32 %v493, %v495
        %v497 = vrot.slane %v483, %v496
        %v499 = vunpack.c.l.s4 1985246804
        %v500 = vunpack.c.0.s8 %v499
        %v501 = vlaneseq
        %v502 = vshrl.u32 %v501, 7
        %v503 = vsub.s32 %v500, %v502
        %v504 = vrot.slane %v483, %v503
        %v506 = vunpack.c.l.s4 839922192
        %v507 = vunpack.c.0.s8 %v506
        %v508 = vlaneseq
        %v509 = vshrl.u32 %v508, 7
        %v510 = vsub.s32 %v507, %v509
        %v511 = vrot.slane %v484, %v510
        %v513 = vunpack.c.l.s4 1985246804
        %v514 = vunpack.c.0.s8 %v513
        %v515 = vlaneseq
        %v516 = vshrl.u32 %v515, 7
        %v517 = vsub.s32 %v514, %v516
        %v518 = vrot.slane %v484, %v517
        %v520 = vunpack.c.l.s4 839922192
        %v521 = vunpack.c.0.s8 %v520
        %v522 = vlaneseq
        %v523 = vshrl.u32 %v522, 7
        %v524 = vsub.s32 %v521, %v523
        %v525 = vrot.slane %v485, %v524
        %v527 = vunpack.c.l.s4 1985246804
        %v528 = vunpack.c.0.s8 %v527
        %v529 = vlaneseq
        %v530 = vshrl.u32 %v529, 7
        %v531 = vsub.s32 %v528, %v530
        %v532 = vrot.slane %v485, %v531
        %v534 = vunpack.c.l.s4 839922192
        %v535 = vunpack.c.0.s8 %v534
        %v536 = vlaneseq
        %v537 = vshrl.u32 %v536, 7
        %v538 = vsub.s32 %v535, %v537
        %v539 = vrot.slane %v486, %v538
        %v541 = vunpack.c.l.s4 1985246804
        %v542 = vunpack.c.0.s8 %v541
        %v543 = vlaneseq
        %v544 = vshrl.u32 %v543, 7
        %v545 = vsub.s32 %v542, %v544
        %v546 = vrot.slane %v486, %v545
        %v555 = vmul.f32 %v431, %v497
        %v556 = vmul.f32 %v432, %v504
        %v557 = vmul.f32 %v433, %v511
        %v558 = vmul.f32 %v434, %v518
        %v559 = vmul.f32 %v435, %v525
        %v560 = vmul.f32 %v436, %v532
        %v561 = vmul.f32 %v437, %v539
        %v562 = vmul.f32 %v438, %v546
        %v564 = vcombine.high %v323, %v323
        %v566 = vmul.f32 %v555, %v323
        %v567 = vmul.f32 %v556, %v564
        %v568 = vmul.f32 %v557, %v323
        %v569 = vmul.f32 %v558, %v564
        %v570 = vmul.f32 %v559, %v323
        %v571 = vmul.f32 %v560, %v564
        %v572 = vmul.f32 %v561, %v323
        %v573 = vmul.f32 %v562, %v564
        %v575 = vcombine.high %v328, %v328
        %v577 = vadd.f32 %v566, %v328
        %v578 = vadd.f32 %v567, %v575
        %v579 = vadd.f32 %v568, %v328
        %v580 = vadd.f32 %v569, %v575
        %v581 = vadd.f32 %v570, %v328
        %v582 = vadd.f32 %v571, %v575
        %v583 = vadd.f32 %v572, %v328
        %v584 = vadd.f32 %v573, %v575
        %v585 = vadd.f32 %v577, 0.0
        %v586 = vadd.f32 %v578, 0.0
        %v587 = vadd.f32 %v579, 0.0
        %v588 = vadd.f32 %v580, 0.0
        %v589 = vadd.f32 %v581, 0.0
        %v590 = vadd.f32 %v582, 0.0
        %v591 = vadd.f32 %v583, 0.0
        %v592 = vadd.f32 %v584, 0.0
        %593 = vrot.lane.b32.xlu0 %v337, 112
        %v594 = vpop.permute.xlu0 %593
        %595 = vrot.lane.b32.xlu0 %v338, 112
        %v596 = vpop.permute.xlu0 %595
        %597 = vrot.lane.b32.xlu0 %v339, 112
        %v598 = vpop.permute.xlu0 %597
        %599 = vrot.lane.b32.xlu0 %v340, 112
        %v600 = vpop.permute.xlu0 %599
        %v605 = vsel %vm345, %v594, 0.0
        %606 = vadd.xlane.f32.xlu0 %v605
        %v607 = vpop.xlane.xlu0 %606
        %v608 = vsel %vm345, %v596, 0.0
        %609 = vadd.xlane.f32.xlu0 %v608
        %v610 = vpop.xlane.xlu0 %609
        %v611 = vsel %vm345, %v598, 0.0
        %612 = vadd.xlane.f32.xlu0 %v611
        %v613 = vpop.xlane.xlu0 %612
        %v614 = vsel %vm345, %v600, 0.0
        %615 = vadd.xlane.f32.xlu0 %v614
        %v616 = vpop.xlane.xlu0 %615
        %v617 = vmul.f32 %v607, %v358
        %v618 = vmul.f32 %v610, %v358
        %v619 = vmul.f32 %v613, %v358
        %v620 = vmul.f32 %v616, %v358
        %v626 = vunpack.c.l.s4 839922192
        %v627 = vunpack.c.0.s8 %v626
        %v628 = vlaneseq
        %v629 = vshrl.u32 %v628, 7
        %v630 = vsub.s32 %v627, %v629
        %v631 = vrot.slane %v617, %v630
        %v633 = vunpack.c.l.s4 1985246804
        %v634 = vunpack.c.0.s8 %v633
        %v635 = vlaneseq
        %v636 = vshrl.u32 %v635, 7
        %v637 = vsub.s32 %v634, %v636
        %v638 = vrot.slane %v617, %v637
        %v640 = vunpack.c.l.s4 839922192
        %v641 = vunpack.c.0.s8 %v640
        %v642 = vlaneseq
        %v643 = vshrl.u32 %v642, 7
        %v644 = vsub.s32 %v641, %v643
        %v645 = vrot.slane %v618, %v644
        %v647 = vunpack.c.l.s4 1985246804
        %v648 = vunpack.c.0.s8 %v647
        %v649 = vlaneseq
        %v650 = vshrl.u32 %v649, 7
        %v651 = vsub.s32 %v648, %v650
        %v652 = vrot.slane %v618, %v651
        %v654 = vunpack.c.l.s4 839922192
        %v655 = vunpack.c.0.s8 %v654
        %v656 = vlaneseq
        %v657 = vshrl.u32 %v656, 7
        %v658 = vsub.s32 %v655, %v657
        %v659 = vrot.slane %v619, %v658
        %v661 = vunpack.c.l.s4 1985246804
        %v662 = vunpack.c.0.s8 %v661
        %v663 = vlaneseq
        %v664 = vshrl.u32 %v663, 7
        %v665 = vsub.s32 %v662, %v664
        %v666 = vrot.slane %v619, %v665
        %v668 = vunpack.c.l.s4 839922192
        %v669 = vunpack.c.0.s8 %v668
        %v670 = vlaneseq
        %v671 = vshrl.u32 %v670, 7
        %v672 = vsub.s32 %v669, %v671
        %v673 = vrot.slane %v620, %v672
        %v675 = vunpack.c.l.s4 1985246804
        %v676 = vunpack.c.0.s8 %v675
        %v677 = vlaneseq
        %v678 = vshrl.u32 %v677, 7
        %v679 = vsub.s32 %v676, %v678
        %v680 = vrot.slane %v620, %v679
        %v689 = vsub.f32 %v303, %v631
        %v690 = vsub.f32 %v305, %v638
        %v691 = vsub.f32 %v307, %v645
        %v692 = vsub.f32 %v309, %v652
        %v693 = vsub.f32 %v311, %v659
        %v694 = vsub.f32 %v313, %v666
        %v695 = vsub.f32 %v315, %v673
        %v696 = vsub.f32 %v317, %v680
        %v697 = vmul.f32 %v689, %v689
        %v698 = vmul.f32 %v690, %v690
        %v699 = vmul.f32 %v691, %v691
        %v700 = vmul.f32 %v692, %v692
        %v701 = vmul.f32 %v693, %v693
        %v702 = vmul.f32 %v694, %v694
        %v703 = vmul.f32 %v695, %v695
        %v704 = vmul.f32 %v696, %v696
        %v713 = vcombine.low %v697, %v698
        %v714 = vcombine.low %v699, %v700
        %v715 = vcombine.low %v701, %v702
        %v716 = vcombine.low %v703, %v704
        %717 = vrot.lane.b32.xlu0 %v713, 112
        %v718 = vpop.permute.xlu0 %717
        %719 = vrot.lane.b32.xlu0 %v714, 112
        %v720 = vpop.permute.xlu0 %719
        %721 = vrot.lane.b32.xlu0 %v715, 112
        %v722 = vpop.permute.xlu0 %721
        %723 = vrot.lane.b32.xlu0 %v716, 112
        %v724 = vpop.permute.xlu0 %723
        %v729 = vsel %vm345, %v718, 0.0
        %730 = vadd.xlane.f32.xlu0 %v729
        %v731 = vpop.xlane.xlu0 %730
        %v732 = vsel %vm345, %v720, 0.0
        %733 = vadd.xlane.f32.xlu0 %v732
        %v734 = vpop.xlane.xlu0 %733
        %v735 = vsel %vm345, %v722, 0.0
        %736 = vadd.xlane.f32.xlu0 %v735
        %v737 = vpop.xlane.xlu0 %736
        %v738 = vsel %vm345, %v724, 0.0
        %739 = vadd.xlane.f32.xlu0 %v738
        %v740 = vpop.xlane.xlu0 %739
        %v741 = vmul.f32 %v731, %v358
        %v742 = vmul.f32 %v734, %v358
        %v743 = vmul.f32 %v737, %v358
        %v744 = vmul.f32 %v740, %v358
        %v745 = vadd.f32 %v741, 1e-06
        %v746 = vadd.f32 %v742, 1e-06
        %v747 = vadd.f32 %v743, 1e-06
        %v748 = vadd.f32 %v744, 1e-06
        %v749 = vrsqrt.pop %v745
        %v750 = vrsqrt.pop %v746
        %v751 = vrsqrt.pop %v747
        %v752 = vrsqrt.pop %v748
        %v758 = vunpack.c.l.s4 839922192
        %v759 = vunpack.c.0.s8 %v758
        %v760 = vlaneseq
        %v761 = vshrl.u32 %v760, 7
        %v762 = vsub.s32 %v759, %v761
        %v763 = vrot.slane %v749, %v762
        %v765 = vunpack.c.l.s4 1985246804
        %v766 = vunpack.c.0.s8 %v765
        %v767 = vlaneseq
        %v768 = vshrl.u32 %v767, 7
        %v769 = vsub.s32 %v766, %v768
        %v770 = vrot.slane %v749, %v769
        %v772 = vunpack.c.l.s4 839922192
        %v773 = vunpack.c.0.s8 %v772
        %v774 = vlaneseq
        %v775 = vshrl.u32 %v774, 7
        %v776 = vsub.s32 %v773, %v775
        %v777 = vrot.slane %v750, %v776
        %v779 = vunpack.c.l.s4 1985246804
        %v780 = vunpack.c.0.s8 %v779
        %v781 = vlaneseq
        %v782 = vshrl.u32 %v781, 7
        %v783 = vsub.s32 %v780, %v782
        %v784 = vrot.slane %v750, %v783
        %v786 = vunpack.c.l.s4 839922192
        %v787 = vunpack.c.0.s8 %v786
        %v788 = vlaneseq
        %v789 = vshrl.u32 %v788, 7
        %v790 = vsub.s32 %v787, %v789
        %v791 = vrot.slane %v751, %v790
        %v793 = vunpack.c.l.s4 1985246804
        %v794 = vunpack.c.0.s8 %v793
        %v795 = vlaneseq
        %v796 = vshrl.u32 %v795, 7
        %v797 = vsub.s32 %v794, %v796
        %v798 = vrot.slane %v751, %v797
        %v800 = vunpack.c.l.s4 839922192
        %v801 = vunpack.c.0.s8 %v800
        %v802 = vlaneseq
        %v803 = vshrl.u32 %v802, 7
        %v804 = vsub.s32 %v801, %v803
        %v805 = vrot.slane %v752, %v804
        %v807 = vunpack.c.l.s4 1985246804
        %v808 = vunpack.c.0.s8 %v807
        %v809 = vlaneseq
        %v810 = vshrl.u32 %v809, 7
        %v811 = vsub.s32 %v808, %v810
        %v812 = vrot.slane %v752, %v811
        %v821 = vmul.f32 %v689, %v763
        %v822 = vmul.f32 %v690, %v770
        %v823 = vmul.f32 %v691, %v777
        %v824 = vmul.f32 %v692, %v784
        %v825 = vmul.f32 %v693, %v791
        %v826 = vmul.f32 %v694, %v798
        %v827 = vmul.f32 %v695, %v805
        %v828 = vmul.f32 %v696, %v812
        %829 = vrot.lane.b32.xlu0 %v323, 16
        %v830 = vpop.permute.xlu0 %829
        %831 = vrot.lane.b32.xlu0 %v564, 16
        %v832 = vpop.permute.xlu0 %831
        %v835 = vmul.f32 %v821, %v830
        %v836 = vmul.f32 %v822, %v832
        %v837 = vmul.f32 %v823, %v830
        %v838 = vmul.f32 %v824, %v832
        %v839 = vmul.f32 %v825, %v830
        %v840 = vmul.f32 %v826, %v832
        %v841 = vmul.f32 %v827, %v830
        %v842 = vmul.f32 %v828, %v832
        %843 = vrot.lane.b32.xlu0 %v328, 16
        %v844 = vpop.permute.xlu0 %843
        %845 = vrot.lane.b32.xlu0 %v575, 16
        %v846 = vpop.permute.xlu0 %845
        %v849 = vadd.f32 %v835, %v844
        %v850 = vadd.f32 %v836, %v846
        %v851 = vadd.f32 %v837, %v844
        %v852 = vadd.f32 %v838, %v846
        %v853 = vadd.f32 %v839, %v844
        %v854 = vadd.f32 %v840, %v846
        %v855 = vadd.f32 %v841, %v844
        %v856 = vadd.f32 %v842, %v846
        %865 = vrot.lane.b32.xlu0 %v849, 112
        %v866 = vpop.permute.xlu0 %865
        %867 = vrot.lane.b32.xlu0 %v850, 112
        %v868 = vpop.permute.xlu0 %867
        %869 = vrot.lane.b32.xlu0 %v851, 112
        %v870 = vpop.permute.xlu0 %869
        %871 = vrot.lane.b32.xlu0 %v852, 112
        %v872 = vpop.permute.xlu0 %871
        %873 = vrot.lane.b32.xlu0 %v853, 112
        %v874 = vpop.permute.xlu0 %873
        %875 = vrot.lane.b32.xlu0 %v854, 112
        %v876 = vpop.permute.xlu0 %875
        %877 = vrot.lane.b32.xlu0 %v855, 112
        %v878 = vpop.permute.xlu0 %877
        %879 = vrot.lane.b32.xlu0 %v856, 112
        %v880 = vpop.permute.xlu0 %879
        %v889 = vadd.f32 %v585, %v866
        %v890 = vadd.f32 %v586, %v868
        %v891 = vadd.f32 %v587, %v870
        %v892 = vadd.f32 %v588, %v872
        %v893 = vadd.f32 %v589, %v874
        %v894 = vadd.f32 %v590, %v876
        %v895 = vadd.f32 %v591, %v878
        %v896 = vadd.f32 %v592, %v880
        %v905 = vcombine.low %v304, %v306
        %v906 = vcombine.low %v308, %v310
        %v907 = vcombine.low %v312, %v314
        %v908 = vcombine.low %v316, %v318
        %v913 = vsel %vm345, %v905, 0.0
        %914 = vadd.xlane.f32.xlu0 %v913
        %v915 = vpop.xlane.xlu0 %914
        %v916 = vsel %vm345, %v906, 0.0
        %917 = vadd.xlane.f32.xlu0 %v916
        %v918 = vpop.xlane.xlu0 %917
        %v919 = vsel %vm345, %v907, 0.0
        %920 = vadd.xlane.f32.xlu0 %v919
        %v921 = vpop.xlane.xlu0 %920
        %v922 = vsel %vm345, %v908, 0.0
        %923 = vadd.xlane.f32.xlu0 %v922
        %v924 = vpop.xlane.xlu0 %923
        %v925 = vmul.f32 %v915, %v358
        %v926 = vmul.f32 %v918, %v358
        %v927 = vmul.f32 %v921, %v358
        %v928 = vmul.f32 %v924, %v358
        %v934 = vunpack.c.l.s4 839922192
        %v935 = vunpack.c.0.s8 %v934
        %v936 = vlaneseq
        %v937 = vshrl.u32 %v936, 7
        %v938 = vsub.s32 %v935, %v937
        %v939 = vrot.slane %v925, %v938
        %v941 = vunpack.c.l.s4 1985246804
        %v942 = vunpack.c.0.s8 %v941
        %v943 = vlaneseq
        %v944 = vshrl.u32 %v943, 7
        %v945 = vsub.s32 %v942, %v944
        %v946 = vrot.slane %v925, %v945
        %v948 = vunpack.c.l.s4 839922192
        %v949 = vunpack.c.0.s8 %v948
        %v950 = vlaneseq
        %v951 = vshrl.u32 %v950, 7
        %v952 = vsub.s32 %v949, %v951
        %v953 = vrot.slane %v926, %v952
        %v955 = vunpack.c.l.s4 1985246804
        %v956 = vunpack.c.0.s8 %v955
        %v957 = vlaneseq
        %v958 = vshrl.u32 %v957, 7
        %v959 = vsub.s32 %v956, %v958
        %v960 = vrot.slane %v926, %v959
        %v962 = vunpack.c.l.s4 839922192
        %v963 = vunpack.c.0.s8 %v962
        %v964 = vlaneseq
        %v965 = vshrl.u32 %v964, 7
        %v966 = vsub.s32 %v963, %v965
        %v967 = vrot.slane %v927, %v966
        %v969 = vunpack.c.l.s4 1985246804
        %v970 = vunpack.c.0.s8 %v969
        %v971 = vlaneseq
        %v972 = vshrl.u32 %v971, 7
        %v973 = vsub.s32 %v970, %v972
        %v974 = vrot.slane %v927, %v973
        %v976 = vunpack.c.l.s4 839922192
        %v977 = vunpack.c.0.s8 %v976
        %v978 = vlaneseq
        %v979 = vshrl.u32 %v978, 7
        %v980 = vsub.s32 %v977, %v979
        %v981 = vrot.slane %v928, %v980
        %v983 = vunpack.c.l.s4 1985246804
        %v984 = vunpack.c.0.s8 %v983
        %v985 = vlaneseq
        %v986 = vshrl.u32 %v985, 7
        %v987 = vsub.s32 %v984, %v986
        %v988 = vrot.slane %v928, %v987
        %v997 = vsub.f32 %v304, %v939
        %v998 = vsub.f32 %v306, %v946
        %v999 = vsub.f32 %v308, %v953
        %v1000 = vsub.f32 %v310, %v960
        %v1001 = vsub.f32 %v312, %v967
        %v1002 = vsub.f32 %v314, %v974
        %v1003 = vsub.f32 %v316, %v981
        %v1004 = vsub.f32 %v318, %v988
        %v1005 = vmul.f32 %v997, %v997
        %v1006 = vmul.f32 %v998, %v998
        %v1007 = vmul.f32 %v999, %v999
        %v1008 = vmul.f32 %v1000, %v1000
        %v1009 = vmul.f32 %v1001, %v1001
        %v1010 = vmul.f32 %v1002, %v1002
        %v1011 = vmul.f32 %v1003, %v1003
        %v1012 = vmul.f32 %v1004, %v1004
        %v1021 = vcombine.low %v1005, %v1006
        %v1022 = vcombine.low %v1007, %v1008
        %v1023 = vcombine.low %v1009, %v1010
        %v1024 = vcombine.low %v1011, %v1012
        %v1029 = vsel %vm345, %v1021, 0.0
        %1030 = vadd.xlane.f32.xlu0 %v1029
        %v1031 = vpop.xlane.xlu0 %1030
        %v1032 = vsel %vm345, %v1022, 0.0
        %1033 = vadd.xlane.f32.xlu0 %v1032
        %v1034 = vpop.xlane.xlu0 %1033
        %v1035 = vsel %vm345, %v1023, 0.0
        %1036 = vadd.xlane.f32.xlu0 %v1035
        %v1037 = vpop.xlane.xlu0 %1036
        %v1038 = vsel %vm345, %v1024, 0.0
        %1039 = vadd.xlane.f32.xlu0 %v1038
        %v1040 = vpop.xlane.xlu0 %1039
        %v1041 = vmul.f32 %v1031, %v358
        %v1042 = vmul.f32 %v1034, %v358
        %v1043 = vmul.f32 %v1037, %v358
        %v1044 = vmul.f32 %v1040, %v358
        %v1045 = vadd.f32 %v1041, 1e-06
        %v1046 = vadd.f32 %v1042, 1e-06
        %v1047 = vadd.f32 %v1043, 1e-06
        %v1048 = vadd.f32 %v1044, 1e-06
        %v1049 = vrsqrt.pop %v1045
        %v1050 = vrsqrt.pop %v1046
        %v1051 = vrsqrt.pop %v1047
        %v1052 = vrsqrt.pop %v1048
        %v1058 = vunpack.c.l.s4 839922192
        %v1059 = vunpack.c.0.s8 %v1058
        %v1060 = vlaneseq
        %v1061 = vshrl.u32 %v1060, 7
        %v1062 = vsub.s32 %v1059, %v1061
        %v1063 = vrot.slane %v1049, %v1062
        %v1065 = vunpack.c.l.s4 1985246804
        %v1066 = vunpack.c.0.s8 %v1065
        %v1067 = vlaneseq
        %v1068 = vshrl.u32 %v1067, 7
        %v1069 = vsub.s32 %v1066, %v1068
        %v1070 = vrot.slane %v1049, %v1069
        %v1072 = vunpack.c.l.s4 839922192
        %v1073 = vunpack.c.0.s8 %v1072
        %v1074 = vlaneseq
        %v1075 = vshrl.u32 %v1074, 7
        %v1076 = vsub.s32 %v1073, %v1075
        %v1077 = vrot.slane %v1050, %v1076
        %v1079 = vunpack.c.l.s4 1985246804
        %v1080 = vunpack.c.0.s8 %v1079
        %v1081 = vlaneseq
        %v1082 = vshrl.u32 %v1081, 7
        %v1083 = vsub.s32 %v1080, %v1082
        %v1084 = vrot.slane %v1050, %v1083
        %v1086 = vunpack.c.l.s4 839922192
        %v1087 = vunpack.c.0.s8 %v1086
        %v1088 = vlaneseq
        %v1089 = vshrl.u32 %v1088, 7
        %v1090 = vsub.s32 %v1087, %v1089
        %v1091 = vrot.slane %v1051, %v1090
        %v1093 = vunpack.c.l.s4 1985246804
        %v1094 = vunpack.c.0.s8 %v1093
        %v1095 = vlaneseq
        %v1096 = vshrl.u32 %v1095, 7
        %v1097 = vsub.s32 %v1094, %v1096
        %v1098 = vrot.slane %v1051, %v1097
        %v1100 = vunpack.c.l.s4 839922192
        %v1101 = vunpack.c.0.s8 %v1100
        %v1102 = vlaneseq
        %v1103 = vshrl.u32 %v1102, 7
        %v1104 = vsub.s32 %v1101, %v1103
        %v1105 = vrot.slane %v1052, %v1104
        %v1107 = vunpack.c.l.s4 1985246804
        %v1108 = vunpack.c.0.s8 %v1107
        %v1109 = vlaneseq
        %v1110 = vshrl.u32 %v1109, 7
        %v1111 = vsub.s32 %v1108, %v1110
        %v1112 = vrot.slane %v1052, %v1111
        %v1121 = vmul.f32 %v997, %v1063
        %v1122 = vmul.f32 %v998, %v1070
        %v1123 = vmul.f32 %v999, %v1077
        %v1124 = vmul.f32 %v1000, %v1084
        %v1125 = vmul.f32 %v1001, %v1091
        %v1126 = vmul.f32 %v1002, %v1098
        %v1127 = vmul.f32 %v1003, %v1105
        %v1128 = vmul.f32 %v1004, %v1112
        %v1129 = vmul.f32 %v1121, %v323
        %v1130 = vmul.f32 %v1122, %v564
        %v1131 = vmul.f32 %v1123, %v323
        %v1132 = vmul.f32 %v1124, %v564
        %v1133 = vmul.f32 %v1125, %v323
        %v1134 = vmul.f32 %v1126, %v564
        %v1135 = vmul.f32 %v1127, %v323
        %v1136 = vmul.f32 %v1128, %v564
        %v1137 = vadd.f32 %v1129, %v328
        %v1138 = vadd.f32 %v1130, %v575
        %v1139 = vadd.f32 %v1131, %v328
        %v1140 = vadd.f32 %v1132, %v575
        %v1141 = vadd.f32 %v1133, %v328
        %v1142 = vadd.f32 %v1134, %v575
        %v1143 = vadd.f32 %v1135, %v328
        %v1144 = vadd.f32 %v1136, %v575
        %v1145 = vadd.f32 %v889, %v1137
        %v1146 = vadd.f32 %v890, %v1138
        %v1147 = vadd.f32 %v891, %v1139
        %v1148 = vadd.f32 %v892, %v1140
        %v1149 = vadd.f32 %v893, %v1141
        %v1150 = vadd.f32 %v894, %v1142
        %v1151 = vadd.f32 %v895, %v1143
        %v1152 = vadd.f32 %v896, %v1144
        %1153 = vrot.lane.b32.xlu0 %v905, 112
        %v1154 = vpop.permute.xlu0 %1153
        %1155 = vrot.lane.b32.xlu0 %v906, 112
        %v1156 = vpop.permute.xlu0 %1155
        %1157 = vrot.lane.b32.xlu0 %v907, 112
        %v1158 = vpop.permute.xlu0 %1157
        %1159 = vrot.lane.b32.xlu0 %v908, 112
        %v1160 = vpop.permute.xlu0 %1159
        %v1165 = vsel %vm345, %v1154, 0.0
        %1166 = vadd.xlane.f32.xlu0 %v1165
        %v1167 = vpop.xlane.xlu0 %1166
        %v1168 = vsel %vm345, %v1156, 0.0
        %1169 = vadd.xlane.f32.xlu0 %v1168
        %v1170 = vpop.xlane.xlu0 %1169
        %v1171 = vsel %vm345, %v1158, 0.0
        %1172 = vadd.xlane.f32.xlu0 %v1171
        %v1173 = vpop.xlane.xlu0 %1172
        %v1174 = vsel %vm345, %v1160, 0.0
        %1175 = vadd.xlane.f32.xlu0 %v1174
        %v1176 = vpop.xlane.xlu0 %1175
        %v1177 = vmul.f32 %v1167, %v358
        %v1178 = vmul.f32 %v1170, %v358
        %v1179 = vmul.f32 %v1173, %v358
        %v1180 = vmul.f32 %v1176, %v358
        %v1186 = vunpack.c.l.s4 839922192
        %v1187 = vunpack.c.0.s8 %v1186
        %v1188 = vlaneseq
        %v1189 = vshrl.u32 %v1188, 7
        %v1190 = vsub.s32 %v1187, %v1189
        %v1191 = vrot.slane %v1177, %v1190
        %v1193 = vunpack.c.l.s4 1985246804
        %v1194 = vunpack.c.0.s8 %v1193
        %v1195 = vlaneseq
        %v1196 = vshrl.u32 %v1195, 7
        %v1197 = vsub.s32 %v1194, %v1196
        %v1198 = vrot.slane %v1177, %v1197
        %v1200 = vunpack.c.l.s4 839922192
        %v1201 = vunpack.c.0.s8 %v1200
        %v1202 = vlaneseq
        %v1203 = vshrl.u32 %v1202, 7
        %v1204 = vsub.s32 %v1201, %v1203
        %v1205 = vrot.slane %v1178, %v1204
        %v1207 = vunpack.c.l.s4 1985246804
        %v1208 = vunpack.c.0.s8 %v1207
        %v1209 = vlaneseq
        %v1210 = vshrl.u32 %v1209, 7
        %v1211 = vsub.s32 %v1208, %v1210
        %v1212 = vrot.slane %v1178, %v1211
        %v1214 = vunpack.c.l.s4 839922192
        %v1215 = vunpack.c.0.s8 %v1214
        %v1216 = vlaneseq
        %v1217 = vshrl.u32 %v1216, 7
        %v1218 = vsub.s32 %v1215, %v1217
        %v1219 = vrot.slane %v1179, %v1218
        %v1221 = vunpack.c.l.s4 1985246804
        %v1222 = vunpack.c.0.s8 %v1221
        %v1223 = vlaneseq
        %v1224 = vshrl.u32 %v1223, 7
        %v1225 = vsub.s32 %v1222, %v1224
        %v1226 = vrot.slane %v1179, %v1225
        %v1228 = vunpack.c.l.s4 839922192
        %v1229 = vunpack.c.0.s8 %v1228
        %v1230 = vlaneseq
        %v1231 = vshrl.u32 %v1230, 7
        %v1232 = vsub.s32 %v1229, %v1231
        %v1233 = vrot.slane %v1180, %v1232
        %v1235 = vunpack.c.l.s4 1985246804
        %v1236 = vunpack.c.0.s8 %v1235
        %v1237 = vlaneseq
        %v1238 = vshrl.u32 %v1237, 7
        %v1239 = vsub.s32 %v1236, %v1238
        %v1240 = vrot.slane %v1180, %v1239
        %v1249 = vsub.f32 %v304, %v1191
        %v1250 = vsub.f32 %v306, %v1198
        %v1251 = vsub.f32 %v308, %v1205
        %v1252 = vsub.f32 %v310, %v1212
        %v1253 = vsub.f32 %v312, %v1219
        %v1254 = vsub.f32 %v314, %v1226
        %v1255 = vsub.f32 %v316, %v1233
        %v1256 = vsub.f32 %v318, %v1240
        %v1257 = vmul.f32 %v1249, %v1249
        %v1258 = vmul.f32 %v1250, %v1250
        %v1259 = vmul.f32 %v1251, %v1251
        %v1260 = vmul.f32 %v1252, %v1252
        %v1261 = vmul.f32 %v1253, %v1253
        %v1262 = vmul.f32 %v1254, %v1254
        %v1263 = vmul.f32 %v1255, %v1255
        %v1264 = vmul.f32 %v1256, %v1256
        %v1273 = vcombine.low %v1257, %v1258
        %v1274 = vcombine.low %v1259, %v1260
        %v1275 = vcombine.low %v1261, %v1262
        %v1276 = vcombine.low %v1263, %v1264
        %1277 = vrot.lane.b32.xlu0 %v1273, 112
        %v1278 = vpop.permute.xlu0 %1277
        %1279 = vrot.lane.b32.xlu0 %v1274, 112
        %v1280 = vpop.permute.xlu0 %1279
        %1281 = vrot.lane.b32.xlu0 %v1275, 112
        %v1282 = vpop.permute.xlu0 %1281
        %1283 = vrot.lane.b32.xlu0 %v1276, 112
        %v1284 = vpop.permute.xlu0 %1283
        %v1289 = vsel %vm345, %v1278, 0.0
        %1290 = vadd.xlane.f32.xlu0 %v1289
        %v1291 = vpop.xlane.xlu0 %1290
        %v1292 = vsel %vm345, %v1280, 0.0
        %1293 = vadd.xlane.f32.xlu0 %v1292
        %v1294 = vpop.xlane.xlu0 %1293
        %v1295 = vsel %vm345, %v1282, 0.0
        %1296 = vadd.xlane.f32.xlu0 %v1295
        %v1297 = vpop.xlane.xlu0 %1296
        %v1298 = vsel %vm345, %v1284, 0.0
        %1299 = vadd.xlane.f32.xlu0 %v1298
        %v1300 = vpop.xlane.xlu0 %1299
        %v1301 = vmul.f32 %v1291, %v358
        %v1302 = vmul.f32 %v1294, %v358
        %v1303 = vmul.f32 %v1297, %v358
        %v1304 = vmul.f32 %v1300, %v358
        %v1305 = vadd.f32 %v1301, 1e-06
        %v1306 = vadd.f32 %v1302, 1e-06
        %v1307 = vadd.f32 %v1303, 1e-06
        %v1308 = vadd.f32 %v1304, 1e-06
        %v1309 = vrsqrt.pop %v1305
        %v1310 = vrsqrt.pop %v1306
        %v1311 = vrsqrt.pop %v1307
        %v1312 = vrsqrt.pop %v1308
        %v1318 = vunpack.c.l.s4 839922192
        %v1319 = vunpack.c.0.s8 %v1318
        %v1320 = vlaneseq
        %v1321 = vshrl.u32 %v1320, 7
        %v1322 = vsub.s32 %v1319, %v1321
        %v1323 = vrot.slane %v1309, %v1322
        %v1325 = vunpack.c.l.s4 1985246804
        %v1326 = vunpack.c.0.s8 %v1325
        %v1327 = vlaneseq
        %v1328 = vshrl.u32 %v1327, 7
        %v1329 = vsub.s32 %v1326, %v1328
        %v1330 = vrot.slane %v1309, %v1329
        %v1332 = vunpack.c.l.s4 839922192
        %v1333 = vunpack.c.0.s8 %v1332
        %v1334 = vlaneseq
        %v1335 = vshrl.u32 %v1334, 7
        %v1336 = vsub.s32 %v1333, %v1335
        %v1337 = vrot.slane %v1310, %v1336
        %v1339 = vunpack.c.l.s4 1985246804
        %v1340 = vunpack.c.0.s8 %v1339
        %v1341 = vlaneseq
        %v1342 = vshrl.u32 %v1341, 7
        %v1343 = vsub.s32 %v1340, %v1342
        %v1344 = vrot.slane %v1310, %v1343
        %v1346 = vunpack.c.l.s4 839922192
        %v1347 = vunpack.c.0.s8 %v1346
        %v1348 = vlaneseq
        %v1349 = vshrl.u32 %v1348, 7
        %v1350 = vsub.s32 %v1347, %v1349
        %v1351 = vrot.slane %v1311, %v1350
        %v1353 = vunpack.c.l.s4 1985246804
        %v1354 = vunpack.c.0.s8 %v1353
        %v1355 = vlaneseq
        %v1356 = vshrl.u32 %v1355, 7
        %v1357 = vsub.s32 %v1354, %v1356
        %v1358 = vrot.slane %v1311, %v1357
        %v1360 = vunpack.c.l.s4 839922192
        %v1361 = vunpack.c.0.s8 %v1360
        %v1362 = vlaneseq
        %v1363 = vshrl.u32 %v1362, 7
        %v1364 = vsub.s32 %v1361, %v1363
        %v1365 = vrot.slane %v1312, %v1364
        %v1367 = vunpack.c.l.s4 1985246804
        %v1368 = vunpack.c.0.s8 %v1367
        %v1369 = vlaneseq
        %v1370 = vshrl.u32 %v1369, 7
        %v1371 = vsub.s32 %v1368, %v1370
        %v1372 = vrot.slane %v1312, %v1371
        %v1381 = vmul.f32 %v1249, %v1323
        %v1382 = vmul.f32 %v1250, %v1330
        %v1383 = vmul.f32 %v1251, %v1337
        %v1384 = vmul.f32 %v1252, %v1344
        %v1385 = vmul.f32 %v1253, %v1351
        %v1386 = vmul.f32 %v1254, %v1358
        %v1387 = vmul.f32 %v1255, %v1365
        %v1388 = vmul.f32 %v1256, %v1372
        %v1389 = vmul.f32 %v1381, %v830
        %v1390 = vmul.f32 %v1382, %v832
        %v1391 = vmul.f32 %v1383, %v830
        %v1392 = vmul.f32 %v1384, %v832
        %v1393 = vmul.f32 %v1385, %v830
        %v1394 = vmul.f32 %v1386, %v832
        %v1395 = vmul.f32 %v1387, %v830
        %v1396 = vmul.f32 %v1388, %v832
        %v1397 = vadd.f32 %v1389, %v844
        %v1398 = vadd.f32 %v1390, %v846
        %v1399 = vadd.f32 %v1391, %v844
        %v1400 = vadd.f32 %v1392, %v846
        %v1401 = vadd.f32 %v1393, %v844
        %v1402 = vadd.f32 %v1394, %v846
        %v1403 = vadd.f32 %v1395, %v844
        %v1404 = vadd.f32 %v1396, %v846
        %1413 = vrot.lane.b32.xlu0 %v1397, 112
        %v1414 = vpop.permute.xlu0 %1413
        %1415 = vrot.lane.b32.xlu0 %v1398, 112
        %v1416 = vpop.permute.xlu0 %1415
        %1417 = vrot.lane.b32.xlu0 %v1399, 112
        %v1418 = vpop.permute.xlu0 %1417
        %1419 = vrot.lane.b32.xlu0 %v1400, 112
        %v1420 = vpop.permute.xlu0 %1419
        %1421 = vrot.lane.b32.xlu0 %v1401, 112
        %v1422 = vpop.permute.xlu0 %1421
        %1423 = vrot.lane.b32.xlu0 %v1402, 112
        %v1424 = vpop.permute.xlu0 %1423
        %1425 = vrot.lane.b32.xlu0 %v1403, 112
        %v1426 = vpop.permute.xlu0 %1425
        %1427 = vrot.lane.b32.xlu0 %v1404, 112
        %v1428 = vpop.permute.xlu0 %1427
        %v1437 = vadd.f32 %v1145, %v1414
        %v1438 = vadd.f32 %v1146, %v1416
        %v1439 = vadd.f32 %v1147, %v1418
        %v1440 = vadd.f32 %v1148, %v1420
        %v1441 = vadd.f32 %v1149, %v1422
        %v1442 = vadd.f32 %v1150, %v1424
        %v1443 = vadd.f32 %v1151, %v1426
        %v1444 = vadd.f32 %v1152, %v1428
        %v1453 = vcombine.low %v577, %v578
        %v1454 = vcombine.low %v579, %v580
        %v1455 = vcombine.low %v581, %v582
        %v1456 = vcombine.low %v583, %v584
        %v1461 = vcombine.low %v849, %v850
        %v1462 = vcombine.low %v851, %v852
        %v1463 = vcombine.low %v853, %v854
        %v1464 = vcombine.low %v855, %v856
        %v1477 = vcombine.low %v1137, %v1138
        %v1478 = vcombine.low %v1139, %v1140
        %v1479 = vcombine.low %v1141, %v1142
        %v1480 = vcombine.low %v1143, %v1144
        %1481 = vrot.lane.b32.xlu0 %v1477, 32
        %v1482 = vpop.permute.xlu0 %1481
        %1483 = vrot.lane.b32.xlu0 %v1478, 32
        %v1484 = vpop.permute.xlu0 %1483
        %1485 = vrot.lane.b32.xlu0 %v1479, 32
        %v1486 = vpop.permute.xlu0 %1485
        %1487 = vrot.lane.b32.xlu0 %v1480, 32
        %v1488 = vpop.permute.xlu0 %1487
        %v1493 = vcombine.low %v1397, %v1398
        %v1494 = vcombine.low %v1399, %v1400
        %v1495 = vcombine.low %v1401, %v1402
        %v1496 = vcombine.low %v1403, %v1404
        %1497 = vrot.lane.b32.xlu0 %v1493, 32
        %v1498 = vpop.permute.xlu0 %1497
        %1499 = vrot.lane.b32.xlu0 %v1494, 32
        %v1500 = vpop.permute.xlu0 %1499
        %1501 = vrot.lane.b32.xlu0 %v1495, 32
        %v1502 = vpop.permute.xlu0 %1501
        %1503 = vrot.lane.b32.xlu0 %v1496, 32
        %v1504 = vpop.permute.xlu0 %1503
        %v1509 = vsel %vm345, %v1453, %v1461
        %v1510 = vsel %vm345, %v1454, %v1462
        %v1511 = vsel %vm345, %v1455, %v1463
        %v1512 = vsel %vm345, %v1456, %v1464
        %vm1513 = vcmask 261120
        %v1514 = vsel %vm1513, %v1509, %v1482
        %v1515 = vsel %vm1513, %v1510, %v1484
        %v1516 = vsel %vm1513, %v1511, %v1486
        %v1517 = vsel %vm1513, %v1512, %v1488
        %vm1518 = vcmask 392192
        %v1519 = vsel %vm1518, %v1514, %v1498
        %v1520 = vsel %vm1518, %v1515, %v1500
        %v1521 = vsel %vm1518, %v1516, %v1502
        %v1522 = vsel %vm1518, %v1517, %v1504
        %v1523 = vmul.f32 %v1437, 0.25
        %v1524 = vmul.f32 %v1438, 0.25
        %v1525 = vmul.f32 %v1439, 0.25
        %v1526 = vmul.f32 %v1440, 0.25
        %v1527 = vmul.f32 %v1441, 0.25
        %v1528 = vmul.f32 %v1442, 0.25
        %v1529 = vmul.f32 %v1443, 0.25
        %v1530 = vmul.f32 %v1444, 0.25
        %1531 = vrot.lane.b32.xlu0 %v337, 96
        %v1532 = vpop.permute.xlu0 %1531
        %1533 = vrot.lane.b32.xlu0 %v338, 96
        %v1534 = vpop.permute.xlu0 %1533
        %1535 = vrot.lane.b32.xlu0 %v339, 96
        %v1536 = vpop.permute.xlu0 %1535
        %1537 = vrot.lane.b32.xlu0 %v340, 96
        %v1538 = vpop.permute.xlu0 %1537
        %v1543 = vsel %vm345, %v1532, 0.0
        %1544 = vadd.xlane.f32.xlu0 %v1543
        %v1545 = vpop.xlane.xlu0 %1544
        %v1546 = vsel %vm345, %v1534, 0.0
        %1547 = vadd.xlane.f32.xlu0 %v1546
        %v1548 = vpop.xlane.xlu0 %1547
        %v1549 = vsel %vm345, %v1536, 0.0
        %1550 = vadd.xlane.f32.xlu0 %v1549
        %v1551 = vpop.xlane.xlu0 %1550
        %v1552 = vsel %vm345, %v1538, 0.0
        %1553 = vadd.xlane.f32.xlu0 %v1552
        %v1554 = vpop.xlane.xlu0 %1553
        %v1555 = vmul.f32 %v1545, %v358
        %v1556 = vmul.f32 %v1548, %v358
        %v1557 = vmul.f32 %v1551, %v358
        %v1558 = vmul.f32 %v1554, %v358
        %v1564 = vunpack.c.l.s4 839922192
        %v1565 = vunpack.c.0.s8 %v1564
        %v1566 = vlaneseq
        %v1567 = vshrl.u32 %v1566, 7
        %v1568 = vsub.s32 %v1565, %v1567
        %v1569 = vrot.slane %v1555, %v1568
        %v1571 = vunpack.c.l.s4 1985246804
        %v1572 = vunpack.c.0.s8 %v1571
        %v1573 = vlaneseq
        %v1574 = vshrl.u32 %v1573, 7
        %v1575 = vsub.s32 %v1572, %v1574
        %v1576 = vrot.slane %v1555, %v1575
        %v1578 = vunpack.c.l.s4 839922192
        %v1579 = vunpack.c.0.s8 %v1578
        %v1580 = vlaneseq
        %v1581 = vshrl.u32 %v1580, 7
        %v1582 = vsub.s32 %v1579, %v1581
        %v1583 = vrot.slane %v1556, %v1582
        %v1585 = vunpack.c.l.s4 1985246804
        %v1586 = vunpack.c.0.s8 %v1585
        %v1587 = vlaneseq
        %v1588 = vshrl.u32 %v1587, 7
        %v1589 = vsub.s32 %v1586, %v1588
        %v1590 = vrot.slane %v1556, %v1589
        %v1592 = vunpack.c.l.s4 839922192
        %v1593 = vunpack.c.0.s8 %v1592
        %v1594 = vlaneseq
        %v1595 = vshrl.u32 %v1594, 7
        %v1596 = vsub.s32 %v1593, %v1595
        %v1597 = vrot.slane %v1557, %v1596
        %v1599 = vunpack.c.l.s4 1985246804
        %v1600 = vunpack.c.0.s8 %v1599
        %v1601 = vlaneseq
        %v1602 = vshrl.u32 %v1601, 7
        %v1603 = vsub.s32 %v1600, %v1602
        %v1604 = vrot.slane %v1557, %v1603
        %v1606 = vunpack.c.l.s4 839922192
        %v1607 = vunpack.c.0.s8 %v1606
        %v1608 = vlaneseq
        %v1609 = vshrl.u32 %v1608, 7
        %v1610 = vsub.s32 %v1607, %v1609
        %v1611 = vrot.slane %v1558, %v1610
        %v1613 = vunpack.c.l.s4 1985246804
        %v1614 = vunpack.c.0.s8 %v1613
        %v1615 = vlaneseq
        %v1616 = vshrl.u32 %v1615, 7
        %v1617 = vsub.s32 %v1614, %v1616
        %v1618 = vrot.slane %v1558, %v1617
        %v1627 = vsub.f32 %v303, %v1569
        %v1628 = vsub.f32 %v305, %v1576
        %v1629 = vsub.f32 %v307, %v1583
        %v1630 = vsub.f32 %v309, %v1590
        %v1631 = vsub.f32 %v311, %v1597
        %v1632 = vsub.f32 %v313, %v1604
        %v1633 = vsub.f32 %v315, %v1611
        %v1634 = vsub.f32 %v317, %v1618
        %v1635 = vmul.f32 %v1627, %v1627
        %v1636 = vmul.f32 %v1628, %v1628
        %v1637 = vmul.f32 %v1629, %v1629
        %v1638 = vmul.f32 %v1630, %v1630
        %v1639 = vmul.f32 %v1631, %v1631
        %v1640 = vmul.f32 %v1632, %v1632
        %v1641 = vmul.f32 %v1633, %v1633
        %v1642 = vmul.f32 %v1634, %v1634
        %v1651 = vcombine.low %v1635, %v1636
        %v1652 = vcombine.low %v1637, %v1638
        %v1653 = vcombine.low %v1639, %v1640
        %v1654 = vcombine.low %v1641, %v1642
        %1655 = vrot.lane.b32.xlu0 %v1651, 96
        %v1656 = vpop.permute.xlu0 %1655
        %1657 = vrot.lane.b32.xlu0 %v1652, 96
        %v1658 = vpop.permute.xlu0 %1657
        %1659 = vrot.lane.b32.xlu0 %v1653, 96
        %v1660 = vpop.permute.xlu0 %1659
        %1661 = vrot.lane.b32.xlu0 %v1654, 96
        %v1662 = vpop.permute.xlu0 %1661
        %v1667 = vsel %vm345, %v1656, 0.0
        %1668 = vadd.xlane.f32.xlu0 %v1667
        %v1669 = vpop.xlane.xlu0 %1668
        %v1670 = vsel %vm345, %v1658, 0.0
        %1671 = vadd.xlane.f32.xlu0 %v1670
        %v1672 = vpop.xlane.xlu0 %1671
        %v1673 = vsel %vm345, %v1660, 0.0
        %1674 = vadd.xlane.f32.xlu0 %v1673
        %v1675 = vpop.xlane.xlu0 %1674
        %v1676 = vsel %vm345, %v1662, 0.0
        %1677 = vadd.xlane.f32.xlu0 %v1676
        %v1678 = vpop.xlane.xlu0 %1677
        %v1679 = vmul.f32 %v1669, %v358
        %v1680 = vmul.f32 %v1672, %v358
        %v1681 = vmul.f32 %v1675, %v358
        %v1682 = vmul.f32 %v1678, %v358
        %v1683 = vadd.f32 %v1679, 1e-06
        %v1684 = vadd.f32 %v1680, 1e-06
        %v1685 = vadd.f32 %v1681, 1e-06
        %v1686 = vadd.f32 %v1682, 1e-06
        %v1687 = vrsqrt.pop %v1683
        %v1688 = vrsqrt.pop %v1684
        %v1689 = vrsqrt.pop %v1685
        %v1690 = vrsqrt.pop %v1686
        %v1696 = vunpack.c.l.s4 839922192
        %v1697 = vunpack.c.0.s8 %v1696
        %v1698 = vlaneseq
        %v1699 = vshrl.u32 %v1698, 7
        %v1700 = vsub.s32 %v1697, %v1699
        %v1701 = vrot.slane %v1687, %v1700
        %v1703 = vunpack.c.l.s4 1985246804
        %v1704 = vunpack.c.0.s8 %v1703
        %v1705 = vlaneseq
        %v1706 = vshrl.u32 %v1705, 7
        %v1707 = vsub.s32 %v1704, %v1706
        %v1708 = vrot.slane %v1687, %v1707
        %v1710 = vunpack.c.l.s4 839922192
        %v1711 = vunpack.c.0.s8 %v1710
        %v1712 = vlaneseq
        %v1713 = vshrl.u32 %v1712, 7
        %v1714 = vsub.s32 %v1711, %v1713
        %v1715 = vrot.slane %v1688, %v1714
        %v1717 = vunpack.c.l.s4 1985246804
        %v1718 = vunpack.c.0.s8 %v1717
        %v1719 = vlaneseq
        %v1720 = vshrl.u32 %v1719, 7
        %v1721 = vsub.s32 %v1718, %v1720
        %v1722 = vrot.slane %v1688, %v1721
        %v1724 = vunpack.c.l.s4 839922192
        %v1725 = vunpack.c.0.s8 %v1724
        %v1726 = vlaneseq
        %v1727 = vshrl.u32 %v1726, 7
        %v1728 = vsub.s32 %v1725, %v1727
        %v1729 = vrot.slane %v1689, %v1728
        %v1731 = vunpack.c.l.s4 1985246804
        %v1732 = vunpack.c.0.s8 %v1731
        %v1733 = vlaneseq
        %v1734 = vshrl.u32 %v1733, 7
        %v1735 = vsub.s32 %v1732, %v1734
        %v1736 = vrot.slane %v1689, %v1735
        %v1738 = vunpack.c.l.s4 839922192
        %v1739 = vunpack.c.0.s8 %v1738
        %v1740 = vlaneseq
        %v1741 = vshrl.u32 %v1740, 7
        %v1742 = vsub.s32 %v1739, %v1741
        %v1743 = vrot.slane %v1690, %v1742
        %v1745 = vunpack.c.l.s4 1985246804
        %v1746 = vunpack.c.0.s8 %v1745
        %v1747 = vlaneseq
        %v1748 = vshrl.u32 %v1747, 7
        %v1749 = vsub.s32 %v1746, %v1748
        %v1750 = vrot.slane %v1690, %v1749
        %v1759 = vmul.f32 %v1627, %v1701
        %v1760 = vmul.f32 %v1628, %v1708
        %v1761 = vmul.f32 %v1629, %v1715
        %v1762 = vmul.f32 %v1630, %v1722
        %v1763 = vmul.f32 %v1631, %v1729
        %v1764 = vmul.f32 %v1632, %v1736
        %v1765 = vmul.f32 %v1633, %v1743
        %v1766 = vmul.f32 %v1634, %v1750
        %1767 = vrot.lane.b32.xlu0 %v323, 32
        %v1768 = vpop.permute.xlu0 %1767
        %1769 = vrot.lane.b32.xlu0 %v564, 32
        %v1770 = vpop.permute.xlu0 %1769
        %v1773 = vmul.f32 %v1759, %v1768
        %v1774 = vmul.f32 %v1760, %v1770
        %v1775 = vmul.f32 %v1761, %v1768
        %v1776 = vmul.f32 %v1762, %v1770
        %v1777 = vmul.f32 %v1763, %v1768
        %v1778 = vmul.f32 %v1764, %v1770
        %v1779 = vmul.f32 %v1765, %v1768
        %v1780 = vmul.f32 %v1766, %v1770
        %1781 = vrot.lane.b32.xlu0 %v328, 32
        %v1782 = vpop.permute.xlu0 %1781
        %1783 = vrot.lane.b32.xlu0 %v575, 32
        %v1784 = vpop.permute.xlu0 %1783
        %v1787 = vadd.f32 %v1773, %v1782
        %v1788 = vadd.f32 %v1774, %v1784
        %v1789 = vadd.f32 %v1775, %v1782
        %v1790 = vadd.f32 %v1776, %v1784
        %v1791 = vadd.f32 %v1777, %v1782
        %v1792 = vadd.f32 %v1778, %v1784
        %v1793 = vadd.f32 %v1779, %v1782
        %v1794 = vadd.f32 %v1780, %v1784
        %v1795 = vadd.f32 %v1787, 0.0
        %v1796 = vadd.f32 %v1788, 0.0
        %v1797 = vadd.f32 %v1789, 0.0
        %v1798 = vadd.f32 %v1790, 0.0
        %v1799 = vadd.f32 %v1791, 0.0
        %v1800 = vadd.f32 %v1792, 0.0
        %v1801 = vadd.f32 %v1793, 0.0
        %v1802 = vadd.f32 %v1794, 0.0
        %1803 = vrot.lane.b32.xlu0 %v337, 80
        %v1804 = vpop.permute.xlu0 %1803
        %1805 = vrot.lane.b32.xlu0 %v338, 80
        %v1806 = vpop.permute.xlu0 %1805
        %1807 = vrot.lane.b32.xlu0 %v339, 80
        %v1808 = vpop.permute.xlu0 %1807
        %1809 = vrot.lane.b32.xlu0 %v340, 80
        %v1810 = vpop.permute.xlu0 %1809
        %v1815 = vsel %vm345, %v1804, 0.0
        %1816 = vadd.xlane.f32.xlu0 %v1815
        %v1817 = vpop.xlane.xlu0 %1816
        %v1818 = vsel %vm345, %v1806, 0.0
        %1819 = vadd.xlane.f32.xlu0 %v1818
        %v1820 = vpop.xlane.xlu0 %1819
        %v1821 = vsel %vm345, %v1808, 0.0
        %1822 = vadd.xlane.f32.xlu0 %v1821
        %v1823 = vpop.xlane.xlu0 %1822
        %v1824 = vsel %vm345, %v1810, 0.0
        %1825 = vadd.xlane.f32.xlu0 %v1824
        %v1826 = vpop.xlane.xlu0 %1825
        %v1827 = vmul.f32 %v1817, %v358
        %v1828 = vmul.f32 %v1820, %v358
        %v1829 = vmul.f32 %v1823, %v358
        %v1830 = vmul.f32 %v1826, %v358
        %v1836 = vunpack.c.l.s4 839922192
        %v1837 = vunpack.c.0.s8 %v1836
        %v1838 = vlaneseq
        %v1839 = vshrl.u32 %v1838, 7
        %v1840 = vsub.s32 %v1837, %v1839
        %v1841 = vrot.slane %v1827, %v1840
        %v1843 = vunpack.c.l.s4 1985246804
        %v1844 = vunpack.c.0.s8 %v1843
        %v1845 = vlaneseq
        %v1846 = vshrl.u32 %v1845, 7
        %v1847 = vsub.s32 %v1844, %v1846
        %v1848 = vrot.slane %v1827, %v1847
        %v1850 = vunpack.c.l.s4 839922192
        %v1851 = vunpack.c.0.s8 %v1850
        %v1852 = vlaneseq
        %v1853 = vshrl.u32 %v1852, 7
        %v1854 = vsub.s32 %v1851, %v1853
        %v1855 = vrot.slane %v1828, %v1854
        %v1857 = vunpack.c.l.s4 1985246804
        %v1858 = vunpack.c.0.s8 %v1857
        %v1859 = vlaneseq
        %v1860 = vshrl.u32 %v1859, 7
        %v1861 = vsub.s32 %v1858, %v1860
        %v1862 = vrot.slane %v1828, %v1861
        %v1864 = vunpack.c.l.s4 839922192
        %v1865 = vunpack.c.0.s8 %v1864
        %v1866 = vlaneseq
        %v1867 = vshrl.u32 %v1866, 7
        %v1868 = vsub.s32 %v1865, %v1867
        %v1869 = vrot.slane %v1829, %v1868
        %v1871 = vunpack.c.l.s4 1985246804
        %v1872 = vunpack.c.0.s8 %v1871
        %v1873 = vlaneseq
        %v1874 = vshrl.u32 %v1873, 7
        %v1875 = vsub.s32 %v1872, %v1874
        %v1876 = vrot.slane %v1829, %v1875
        %v1878 = vunpack.c.l.s4 839922192
        %v1879 = vunpack.c.0.s8 %v1878
        %v1880 = vlaneseq
        %v1881 = vshrl.u32 %v1880, 7
        %v1882 = vsub.s32 %v1879, %v1881
        %v1883 = vrot.slane %v1830, %v1882
        %v1885 = vunpack.c.l.s4 1985246804
        %v1886 = vunpack.c.0.s8 %v1885
        %v1887 = vlaneseq
        %v1888 = vshrl.u32 %v1887, 7
        %v1889 = vsub.s32 %v1886, %v1888
        %v1890 = vrot.slane %v1830, %v1889
        %v1899 = vsub.f32 %v303, %v1841
        %v1900 = vsub.f32 %v305, %v1848
        %v1901 = vsub.f32 %v307, %v1855
        %v1902 = vsub.f32 %v309, %v1862
        %v1903 = vsub.f32 %v311, %v1869
        %v1904 = vsub.f32 %v313, %v1876
        %v1905 = vsub.f32 %v315, %v1883
        %v1906 = vsub.f32 %v317, %v1890
        %v1907 = vmul.f32 %v1899, %v1899
        %v1908 = vmul.f32 %v1900, %v1900
        %v1909 = vmul.f32 %v1901, %v1901
        %v1910 = vmul.f32 %v1902, %v1902
        %v1911 = vmul.f32 %v1903, %v1903
        %v1912 = vmul.f32 %v1904, %v1904
        %v1913 = vmul.f32 %v1905, %v1905
        %v1914 = vmul.f32 %v1906, %v1906
        %v1923 = vcombine.low %v1907, %v1908
        %v1924 = vcombine.low %v1909, %v1910
        %v1925 = vcombine.low %v1911, %v1912
        %v1926 = vcombine.low %v1913, %v1914
        %1927 = vrot.lane.b32.xlu0 %v1923, 80
        %v1928 = vpop.permute.xlu0 %1927
        %1929 = vrot.lane.b32.xlu0 %v1924, 80
        %v1930 = vpop.permute.xlu0 %1929
        %1931 = vrot.lane.b32.xlu0 %v1925, 80
        %v1932 = vpop.permute.xlu0 %1931
        %1933 = vrot.lane.b32.xlu0 %v1926, 80
        %v1934 = vpop.permute.xlu0 %1933
        %v1939 = vsel %vm345, %v1928, 0.0
        %1940 = vadd.xlane.f32.xlu0 %v1939
        %v1941 = vpop.xlane.xlu0 %1940
        %v1942 = vsel %vm345, %v1930, 0.0
        %1943 = vadd.xlane.f32.xlu0 %v1942
        %v1944 = vpop.xlane.xlu0 %1943
        %v1945 = vsel %vm345, %v1932, 0.0
        %1946 = vadd.xlane.f32.xlu0 %v1945
        %v1947 = vpop.xlane.xlu0 %1946
        %v1948 = vsel %vm345, %v1934, 0.0
        %1949 = vadd.xlane.f32.xlu0 %v1948
        %v1950 = vpop.xlane.xlu0 %1949
        %v1951 = vmul.f32 %v1941, %v358
        %v1952 = vmul.f32 %v1944, %v358
        %v1953 = vmul.f32 %v1947, %v358
        %v1954 = vmul.f32 %v1950, %v358
        %v1955 = vadd.f32 %v1951, 1e-06
        %v1956 = vadd.f32 %v1952, 1e-06
        %v1957 = vadd.f32 %v1953, 1e-06
        %v1958 = vadd.f32 %v1954, 1e-06
        %v1959 = vrsqrt.pop %v1955
        %v1960 = vrsqrt.pop %v1956
        %v1961 = vrsqrt.pop %v1957
        %v1962 = vrsqrt.pop %v1958
        %v1968 = vunpack.c.l.s4 839922192
        %v1969 = vunpack.c.0.s8 %v1968
        %v1970 = vlaneseq
        %v1971 = vshrl.u32 %v1970, 7
        %v1972 = vsub.s32 %v1969, %v1971
        %v1973 = vrot.slane %v1959, %v1972
        %v1975 = vunpack.c.l.s4 1985246804
        %v1976 = vunpack.c.0.s8 %v1975
        %v1977 = vlaneseq
        %v1978 = vshrl.u32 %v1977, 7
        %v1979 = vsub.s32 %v1976, %v1978
        %v1980 = vrot.slane %v1959, %v1979
        %v1982 = vunpack.c.l.s4 839922192
        %v1983 = vunpack.c.0.s8 %v1982
        %v1984 = vlaneseq
        %v1985 = vshrl.u32 %v1984, 7
        %v1986 = vsub.s32 %v1983, %v1985
        %v1987 = vrot.slane %v1960, %v1986
        %v1989 = vunpack.c.l.s4 1985246804
        %v1990 = vunpack.c.0.s8 %v1989
        %v1991 = vlaneseq
        %v1992 = vshrl.u32 %v1991, 7
        %v1993 = vsub.s32 %v1990, %v1992
        %v1994 = vrot.slane %v1960, %v1993
        %v1996 = vunpack.c.l.s4 839922192
        %v1997 = vunpack.c.0.s8 %v1996
        %v1998 = vlaneseq
        %v1999 = vshrl.u32 %v1998, 7
        %v2000 = vsub.s32 %v1997, %v1999
        %v2001 = vrot.slane %v1961, %v2000
        %v2003 = vunpack.c.l.s4 1985246804
        %v2004 = vunpack.c.0.s8 %v2003
        %v2005 = vlaneseq
        %v2006 = vshrl.u32 %v2005, 7
        %v2007 = vsub.s32 %v2004, %v2006
        %v2008 = vrot.slane %v1961, %v2007
        %v2010 = vunpack.c.l.s4 839922192
        %v2011 = vunpack.c.0.s8 %v2010
        %v2012 = vlaneseq
        %v2013 = vshrl.u32 %v2012, 7
        %v2014 = vsub.s32 %v2011, %v2013
        %v2015 = vrot.slane %v1962, %v2014
        %v2017 = vunpack.c.l.s4 1985246804
        %v2018 = vunpack.c.0.s8 %v2017
        %v2019 = vlaneseq
        %v2020 = vshrl.u32 %v2019, 7
        %v2021 = vsub.s32 %v2018, %v2020
        %v2022 = vrot.slane %v1962, %v2021
        %v2031 = vmul.f32 %v1899, %v1973
        %v2032 = vmul.f32 %v1900, %v1980
        %v2033 = vmul.f32 %v1901, %v1987
        %v2034 = vmul.f32 %v1902, %v1994
        %v2035 = vmul.f32 %v1903, %v2001
        %v2036 = vmul.f32 %v1904, %v2008
        %v2037 = vmul.f32 %v1905, %v2015
        %v2038 = vmul.f32 %v1906, %v2022
        %2039 = vrot.lane.b32.xlu0 %v323, 48
        %v2040 = vpop.permute.xlu0 %2039
        %2041 = vrot.lane.b32.xlu0 %v564, 48
        %v2042 = vpop.permute.xlu0 %2041
        %v2045 = vmul.f32 %v2031, %v2040
        %v2046 = vmul.f32 %v2032, %v2042
        %v2047 = vmul.f32 %v2033, %v2040
        %v2048 = vmul.f32 %v2034, %v2042
        %v2049 = vmul.f32 %v2035, %v2040
        %v2050 = vmul.f32 %v2036, %v2042
        %v2051 = vmul.f32 %v2037, %v2040
        %v2052 = vmul.f32 %v2038, %v2042
        %2053 = vrot.lane.b32.xlu0 %v328, 48
        %v2054 = vpop.permute.xlu0 %2053
        %2055 = vrot.lane.b32.xlu0 %v575, 48
        %v2056 = vpop.permute.xlu0 %2055
        %v2059 = vadd.f32 %v2045, %v2054
        %v2060 = vadd.f32 %v2046, %v2056
        %v2061 = vadd.f32 %v2047, %v2054
        %v2062 = vadd.f32 %v2048, %v2056
        %v2063 = vadd.f32 %v2049, %v2054
        %v2064 = vadd.f32 %v2050, %v2056
        %v2065 = vadd.f32 %v2051, %v2054
        %v2066 = vadd.f32 %v2052, %v2056
        %2075 = vrot.lane.b32.xlu0 %v2059, 112
        %v2076 = vpop.permute.xlu0 %2075
        %2077 = vrot.lane.b32.xlu0 %v2060, 112
        %v2078 = vpop.permute.xlu0 %2077
        %2079 = vrot.lane.b32.xlu0 %v2061, 112
        %v2080 = vpop.permute.xlu0 %2079
        %2081 = vrot.lane.b32.xlu0 %v2062, 112
        %v2082 = vpop.permute.xlu0 %2081
        %2083 = vrot.lane.b32.xlu0 %v2063, 112
        %v2084 = vpop.permute.xlu0 %2083
        %2085 = vrot.lane.b32.xlu0 %v2064, 112
        %v2086 = vpop.permute.xlu0 %2085
        %2087 = vrot.lane.b32.xlu0 %v2065, 112
        %v2088 = vpop.permute.xlu0 %2087
        %2089 = vrot.lane.b32.xlu0 %v2066, 112
        %v2090 = vpop.permute.xlu0 %2089
        %v2099 = vadd.f32 %v1795, %v2076
        %v2100 = vadd.f32 %v1796, %v2078
        %v2101 = vadd.f32 %v1797, %v2080
        %v2102 = vadd.f32 %v1798, %v2082
        %v2103 = vadd.f32 %v1799, %v2084
        %v2104 = vadd.f32 %v1800, %v2086
        %v2105 = vadd.f32 %v1801, %v2088
        %v2106 = vadd.f32 %v1802, %v2090
        %2107 = vrot.lane.b32.xlu0 %v905, 96
        %v2108 = vpop.permute.xlu0 %2107
        %2109 = vrot.lane.b32.xlu0 %v906, 96
        %v2110 = vpop.permute.xlu0 %2109
        %2111 = vrot.lane.b32.xlu0 %v907, 96
        %v2112 = vpop.permute.xlu0 %2111
        %2113 = vrot.lane.b32.xlu0 %v908, 96
        %v2114 = vpop.permute.xlu0 %2113
        %v2119 = vsel %vm345, %v2108, 0.0
        %2120 = vadd.xlane.f32.xlu0 %v2119
        %v2121 = vpop.xlane.xlu0 %2120
        %v2122 = vsel %vm345, %v2110, 0.0
        %2123 = vadd.xlane.f32.xlu0 %v2122
        %v2124 = vpop.xlane.xlu0 %2123
        %v2125 = vsel %vm345, %v2112, 0.0
        %2126 = vadd.xlane.f32.xlu0 %v2125
        %v2127 = vpop.xlane.xlu0 %2126
        %v2128 = vsel %vm345, %v2114, 0.0
        %2129 = vadd.xlane.f32.xlu0 %v2128
        %v2130 = vpop.xlane.xlu0 %2129
        %v2131 = vmul.f32 %v2121, %v358
        %v2132 = vmul.f32 %v2124, %v358
        %v2133 = vmul.f32 %v2127, %v358
        %v2134 = vmul.f32 %v2130, %v358
        %v2140 = vunpack.c.l.s4 839922192
        %v2141 = vunpack.c.0.s8 %v2140
        %v2142 = vlaneseq
        %v2143 = vshrl.u32 %v2142, 7
        %v2144 = vsub.s32 %v2141, %v2143
        %v2145 = vrot.slane %v2131, %v2144
        %v2147 = vunpack.c.l.s4 1985246804
        %v2148 = vunpack.c.0.s8 %v2147
        %v2149 = vlaneseq
        %v2150 = vshrl.u32 %v2149, 7
        %v2151 = vsub.s32 %v2148, %v2150
        %v2152 = vrot.slane %v2131, %v2151
        %v2154 = vunpack.c.l.s4 839922192
        %v2155 = vunpack.c.0.s8 %v2154
        %v2156 = vlaneseq
        %v2157 = vshrl.u32 %v2156, 7
        %v2158 = vsub.s32 %v2155, %v2157
        %v2159 = vrot.slane %v2132, %v2158
        %v2161 = vunpack.c.l.s4 1985246804
        %v2162 = vunpack.c.0.s8 %v2161
        %v2163 = vlaneseq
        %v2164 = vshrl.u32 %v2163, 7
        %v2165 = vsub.s32 %v2162, %v2164
        %v2166 = vrot.slane %v2132, %v2165
        %v2168 = vunpack.c.l.s4 839922192
        %v2169 = vunpack.c.0.s8 %v2168
        %v2170 = vlaneseq
        %v2171 = vshrl.u32 %v2170, 7
        %v2172 = vsub.s32 %v2169, %v2171
        %v2173 = vrot.slane %v2133, %v2172
        %v2175 = vunpack.c.l.s4 1985246804
        %v2176 = vunpack.c.0.s8 %v2175
        %v2177 = vlaneseq
        %v2178 = vshrl.u32 %v2177, 7
        %v2179 = vsub.s32 %v2176, %v2178
        %v2180 = vrot.slane %v2133, %v2179
        %v2182 = vunpack.c.l.s4 839922192
        %v2183 = vunpack.c.0.s8 %v2182
        %v2184 = vlaneseq
        %v2185 = vshrl.u32 %v2184, 7
        %v2186 = vsub.s32 %v2183, %v2185
        %v2187 = vrot.slane %v2134, %v2186
        %v2189 = vunpack.c.l.s4 1985246804
        %v2190 = vunpack.c.0.s8 %v2189
        %v2191 = vlaneseq
        %v2192 = vshrl.u32 %v2191, 7
        %v2193 = vsub.s32 %v2190, %v2192
        %v2194 = vrot.slane %v2134, %v2193
        %v2203 = vsub.f32 %v304, %v2145
        %v2204 = vsub.f32 %v306, %v2152
        %v2205 = vsub.f32 %v308, %v2159
        %v2206 = vsub.f32 %v310, %v2166
        %v2207 = vsub.f32 %v312, %v2173
        %v2208 = vsub.f32 %v314, %v2180
        %v2209 = vsub.f32 %v316, %v2187
        %v2210 = vsub.f32 %v318, %v2194
        %v2211 = vmul.f32 %v2203, %v2203
        %v2212 = vmul.f32 %v2204, %v2204
        %v2213 = vmul.f32 %v2205, %v2205
        %v2214 = vmul.f32 %v2206, %v2206
        %v2215 = vmul.f32 %v2207, %v2207
        %v2216 = vmul.f32 %v2208, %v2208
        %v2217 = vmul.f32 %v2209, %v2209
        %v2218 = vmul.f32 %v2210, %v2210
        %v2227 = vcombine.low %v2211, %v2212
        %v2228 = vcombine.low %v2213, %v2214
        %v2229 = vcombine.low %v2215, %v2216
        %v2230 = vcombine.low %v2217, %v2218
        %2231 = vrot.lane.b32.xlu0 %v2227, 96
        %v2232 = vpop.permute.xlu0 %2231
        %2233 = vrot.lane.b32.xlu0 %v2228, 96
        %v2234 = vpop.permute.xlu0 %2233
        %2235 = vrot.lane.b32.xlu0 %v2229, 96
        %v2236 = vpop.permute.xlu0 %2235
        %2237 = vrot.lane.b32.xlu0 %v2230, 96
        %v2238 = vpop.permute.xlu0 %2237
        %v2243 = vsel %vm345, %v2232, 0.0
        %2244 = vadd.xlane.f32.xlu0 %v2243
        %v2245 = vpop.xlane.xlu0 %2244
        %v2246 = vsel %vm345, %v2234, 0.0
        %2247 = vadd.xlane.f32.xlu0 %v2246
        %v2248 = vpop.xlane.xlu0 %2247
        %v2249 = vsel %vm345, %v2236, 0.0
        %2250 = vadd.xlane.f32.xlu0 %v2249
        %v2251 = vpop.xlane.xlu0 %2250
        %v2252 = vsel %vm345, %v2238, 0.0
        %2253 = vadd.xlane.f32.xlu0 %v2252
        %v2254 = vpop.xlane.xlu0 %2253
        %v2255 = vmul.f32 %v2245, %v358
        %v2256 = vmul.f32 %v2248, %v358
        %v2257 = vmul.f32 %v2251, %v358
        %v2258 = vmul.f32 %v2254, %v358
        %v2259 = vadd.f32 %v2255, 1e-06
        %v2260 = vadd.f32 %v2256, 1e-06
        %v2261 = vadd.f32 %v2257, 1e-06
        %v2262 = vadd.f32 %v2258, 1e-06
        %v2263 = vrsqrt.pop %v2259
        %v2264 = vrsqrt.pop %v2260
        %v2265 = vrsqrt.pop %v2261
        %v2266 = vrsqrt.pop %v2262
        %v2272 = vunpack.c.l.s4 839922192
        %v2273 = vunpack.c.0.s8 %v2272
        %v2274 = vlaneseq
        %v2275 = vshrl.u32 %v2274, 7
        %v2276 = vsub.s32 %v2273, %v2275
        %v2277 = vrot.slane %v2263, %v2276
        %v2279 = vunpack.c.l.s4 1985246804
        %v2280 = vunpack.c.0.s8 %v2279
        %v2281 = vlaneseq
        %v2282 = vshrl.u32 %v2281, 7
        %v2283 = vsub.s32 %v2280, %v2282
        %v2284 = vrot.slane %v2263, %v2283
        %v2286 = vunpack.c.l.s4 839922192
        %v2287 = vunpack.c.0.s8 %v2286
        %v2288 = vlaneseq
        %v2289 = vshrl.u32 %v2288, 7
        %v2290 = vsub.s32 %v2287, %v2289
        %v2291 = vrot.slane %v2264, %v2290
        %v2293 = vunpack.c.l.s4 1985246804
        %v2294 = vunpack.c.0.s8 %v2293
        %v2295 = vlaneseq
        %v2296 = vshrl.u32 %v2295, 7
        %v2297 = vsub.s32 %v2294, %v2296
        %v2298 = vrot.slane %v2264, %v2297
        %v2300 = vunpack.c.l.s4 839922192
        %v2301 = vunpack.c.0.s8 %v2300
        %v2302 = vlaneseq
        %v2303 = vshrl.u32 %v2302, 7
        %v2304 = vsub.s32 %v2301, %v2303
        %v2305 = vrot.slane %v2265, %v2304
        %v2307 = vunpack.c.l.s4 1985246804
        %v2308 = vunpack.c.0.s8 %v2307
        %v2309 = vlaneseq
        %v2310 = vshrl.u32 %v2309, 7
        %v2311 = vsub.s32 %v2308, %v2310
        %v2312 = vrot.slane %v2265, %v2311
        %v2314 = vunpack.c.l.s4 839922192
        %v2315 = vunpack.c.0.s8 %v2314
        %v2316 = vlaneseq
        %v2317 = vshrl.u32 %v2316, 7
        %v2318 = vsub.s32 %v2315, %v2317
        %v2319 = vrot.slane %v2266, %v2318
        %v2321 = vunpack.c.l.s4 1985246804
        %v2322 = vunpack.c.0.s8 %v2321
        %v2323 = vlaneseq
        %v2324 = vshrl.u32 %v2323, 7
        %v2325 = vsub.s32 %v2322, %v2324
        %v2326 = vrot.slane %v2266, %v2325
        %v2335 = vmul.f32 %v2203, %v2277
        %v2336 = vmul.f32 %v2204, %v2284
        %v2337 = vmul.f32 %v2205, %v2291
        %v2338 = vmul.f32 %v2206, %v2298
        %v2339 = vmul.f32 %v2207, %v2305
        %v2340 = vmul.f32 %v2208, %v2312
        %v2341 = vmul.f32 %v2209, %v2319
        %v2342 = vmul.f32 %v2210, %v2326
        %v2343 = vmul.f32 %v2335, %v1768
        %v2344 = vmul.f32 %v2336, %v1770
        %v2345 = vmul.f32 %v2337, %v1768
        %v2346 = vmul.f32 %v2338, %v1770
        %v2347 = vmul.f32 %v2339, %v1768
        %v2348 = vmul.f32 %v2340, %v1770
        %v2349 = vmul.f32 %v2341, %v1768
        %v2350 = vmul.f32 %v2342, %v1770
        %v2351 = vadd.f32 %v2343, %v1782
        %v2352 = vadd.f32 %v2344, %v1784
        %v2353 = vadd.f32 %v2345, %v1782
        %v2354 = vadd.f32 %v2346, %v1784
        %v2355 = vadd.f32 %v2347, %v1782
        %v2356 = vadd.f32 %v2348, %v1784
        %v2357 = vadd.f32 %v2349, %v1782
        %v2358 = vadd.f32 %v2350, %v1784
        %v2359 = vadd.f32 %v2099, %v2351
        %v2360 = vadd.f32 %v2100, %v2352
        %v2361 = vadd.f32 %v2101, %v2353
        %v2362 = vadd.f32 %v2102, %v2354
        %v2363 = vadd.f32 %v2103, %v2355
        %v2364 = vadd.f32 %v2104, %v2356
        %v2365 = vadd.f32 %v2105, %v2357
        %v2366 = vadd.f32 %v2106, %v2358
        %2367 = vrot.lane.b32.xlu0 %v905, 80
        %v2368 = vpop.permute.xlu0 %2367
        %2369 = vrot.lane.b32.xlu0 %v906, 80
        %v2370 = vpop.permute.xlu0 %2369
        %2371 = vrot.lane.b32.xlu0 %v907, 80
        %v2372 = vpop.permute.xlu0 %2371
        %2373 = vrot.lane.b32.xlu0 %v908, 80
        %v2374 = vpop.permute.xlu0 %2373
        %v2379 = vsel %vm345, %v2368, 0.0
        %2380 = vadd.xlane.f32.xlu0 %v2379
        %v2381 = vpop.xlane.xlu0 %2380
        %v2382 = vsel %vm345, %v2370, 0.0
        %2383 = vadd.xlane.f32.xlu0 %v2382
        %v2384 = vpop.xlane.xlu0 %2383
        %v2385 = vsel %vm345, %v2372, 0.0
        %2386 = vadd.xlane.f32.xlu0 %v2385
        %v2387 = vpop.xlane.xlu0 %2386
        %v2388 = vsel %vm345, %v2374, 0.0
        %2389 = vadd.xlane.f32.xlu0 %v2388
        %v2390 = vpop.xlane.xlu0 %2389
        %v2391 = vmul.f32 %v2381, %v358
        %v2392 = vmul.f32 %v2384, %v358
        %v2393 = vmul.f32 %v2387, %v358
        %v2394 = vmul.f32 %v2390, %v358
        %v2400 = vunpack.c.l.s4 839922192
        %v2401 = vunpack.c.0.s8 %v2400
        %v2402 = vlaneseq
        %v2403 = vshrl.u32 %v2402, 7
        %v2404 = vsub.s32 %v2401, %v2403
        %v2405 = vrot.slane %v2391, %v2404
        %v2407 = vunpack.c.l.s4 1985246804
        %v2408 = vunpack.c.0.s8 %v2407
        %v2409 = vlaneseq
        %v2410 = vshrl.u32 %v2409, 7
        %v2411 = vsub.s32 %v2408, %v2410
        %v2412 = vrot.slane %v2391, %v2411
        %v2414 = vunpack.c.l.s4 839922192
        %v2415 = vunpack.c.0.s8 %v2414
        %v2416 = vlaneseq
        %v2417 = vshrl.u32 %v2416, 7
        %v2418 = vsub.s32 %v2415, %v2417
        %v2419 = vrot.slane %v2392, %v2418
        %v2421 = vunpack.c.l.s4 1985246804
        %v2422 = vunpack.c.0.s8 %v2421
        %v2423 = vlaneseq
        %v2424 = vshrl.u32 %v2423, 7
        %v2425 = vsub.s32 %v2422, %v2424
        %v2426 = vrot.slane %v2392, %v2425
        %v2428 = vunpack.c.l.s4 839922192
        %v2429 = vunpack.c.0.s8 %v2428
        %v2430 = vlaneseq
        %v2431 = vshrl.u32 %v2430, 7
        %v2432 = vsub.s32 %v2429, %v2431
        %v2433 = vrot.slane %v2393, %v2432
        %v2435 = vunpack.c.l.s4 1985246804
        %v2436 = vunpack.c.0.s8 %v2435
        %v2437 = vlaneseq
        %v2438 = vshrl.u32 %v2437, 7
        %v2439 = vsub.s32 %v2436, %v2438
        %v2440 = vrot.slane %v2393, %v2439
        %v2442 = vunpack.c.l.s4 839922192
        %v2443 = vunpack.c.0.s8 %v2442
        %v2444 = vlaneseq
        %v2445 = vshrl.u32 %v2444, 7
        %v2446 = vsub.s32 %v2443, %v2445
        %v2447 = vrot.slane %v2394, %v2446
        %v2449 = vunpack.c.l.s4 1985246804
        %v2450 = vunpack.c.0.s8 %v2449
        %v2451 = vlaneseq
        %v2452 = vshrl.u32 %v2451, 7
        %v2453 = vsub.s32 %v2450, %v2452
        %v2454 = vrot.slane %v2394, %v2453
        %v2463 = vsub.f32 %v304, %v2405
        %v2464 = vsub.f32 %v306, %v2412
        %v2465 = vsub.f32 %v308, %v2419
        %v2466 = vsub.f32 %v310, %v2426
        %v2467 = vsub.f32 %v312, %v2433
        %v2468 = vsub.f32 %v314, %v2440
        %v2469 = vsub.f32 %v316, %v2447
        %v2470 = vsub.f32 %v318, %v2454
        %v2471 = vmul.f32 %v2463, %v2463
        %v2472 = vmul.f32 %v2464, %v2464
        %v2473 = vmul.f32 %v2465, %v2465
        %v2474 = vmul.f32 %v2466, %v2466
        %v2475 = vmul.f32 %v2467, %v2467
        %v2476 = vmul.f32 %v2468, %v2468
        %v2477 = vmul.f32 %v2469, %v2469
        %v2478 = vmul.f32 %v2470, %v2470
        %v2487 = vcombine.low %v2471, %v2472
        %v2488 = vcombine.low %v2473, %v2474
        %v2489 = vcombine.low %v2475, %v2476
        %v2490 = vcombine.low %v2477, %v2478
        %2491 = vrot.lane.b32.xlu0 %v2487, 80
        %v2492 = vpop.permute.xlu0 %2491
        %2493 = vrot.lane.b32.xlu0 %v2488, 80
        %v2494 = vpop.permute.xlu0 %2493
        %2495 = vrot.lane.b32.xlu0 %v2489, 80
        %v2496 = vpop.permute.xlu0 %2495
        %2497 = vrot.lane.b32.xlu0 %v2490, 80
        %v2498 = vpop.permute.xlu0 %2497
        %v2503 = vsel %vm345, %v2492, 0.0
        %2504 = vadd.xlane.f32.xlu0 %v2503
        %v2505 = vpop.xlane.xlu0 %2504
        %v2506 = vsel %vm345, %v2494, 0.0
        %2507 = vadd.xlane.f32.xlu0 %v2506
        %v2508 = vpop.xlane.xlu0 %2507
        %v2509 = vsel %vm345, %v2496, 0.0
        %2510 = vadd.xlane.f32.xlu0 %v2509
        %v2511 = vpop.xlane.xlu0 %2510
        %v2512 = vsel %vm345, %v2498, 0.0
        %2513 = vadd.xlane.f32.xlu0 %v2512
        %v2514 = vpop.xlane.xlu0 %2513
        %v2515 = vmul.f32 %v2505, %v358
        %v2516 = vmul.f32 %v2508, %v358
        %v2517 = vmul.f32 %v2511, %v358
        %v2518 = vmul.f32 %v2514, %v358
        %v2519 = vadd.f32 %v2515, 1e-06
        %v2520 = vadd.f32 %v2516, 1e-06
        %v2521 = vadd.f32 %v2517, 1e-06
        %v2522 = vadd.f32 %v2518, 1e-06
        %v2523 = vrsqrt.pop %v2519
        %v2524 = vrsqrt.pop %v2520
        %v2525 = vrsqrt.pop %v2521
        %v2526 = vrsqrt.pop %v2522
        %v2532 = vunpack.c.l.s4 839922192
        %v2533 = vunpack.c.0.s8 %v2532
        %v2534 = vlaneseq
        %v2535 = vshrl.u32 %v2534, 7
        %v2536 = vsub.s32 %v2533, %v2535
        %v2537 = vrot.slane %v2523, %v2536
        %v2539 = vunpack.c.l.s4 1985246804
        %v2540 = vunpack.c.0.s8 %v2539
        %v2541 = vlaneseq
        %v2542 = vshrl.u32 %v2541, 7
        %v2543 = vsub.s32 %v2540, %v2542
        %v2544 = vrot.slane %v2523, %v2543
        %v2546 = vunpack.c.l.s4 839922192
        %v2547 = vunpack.c.0.s8 %v2546
        %v2548 = vlaneseq
        %v2549 = vshrl.u32 %v2548, 7
        %v2550 = vsub.s32 %v2547, %v2549
        %v2551 = vrot.slane %v2524, %v2550
        %v2553 = vunpack.c.l.s4 1985246804
        %v2554 = vunpack.c.0.s8 %v2553
        %v2555 = vlaneseq
        %v2556 = vshrl.u32 %v2555, 7
        %v2557 = vsub.s32 %v2554, %v2556
        %v2558 = vrot.slane %v2524, %v2557
        %v2560 = vunpack.c.l.s4 839922192
        %v2561 = vunpack.c.0.s8 %v2560
        %v2562 = vlaneseq
        %v2563 = vshrl.u32 %v2562, 7
        %v2564 = vsub.s32 %v2561, %v2563
        %v2565 = vrot.slane %v2525, %v2564
        %v2567 = vunpack.c.l.s4 1985246804
        %v2568 = vunpack.c.0.s8 %v2567
        %v2569 = vlaneseq
        %v2570 = vshrl.u32 %v2569, 7
        %v2571 = vsub.s32 %v2568, %v2570
        %v2572 = vrot.slane %v2525, %v2571
        %v2574 = vunpack.c.l.s4 839922192
        %v2575 = vunpack.c.0.s8 %v2574
        %v2576 = vlaneseq
        %v2577 = vshrl.u32 %v2576, 7
        %v2578 = vsub.s32 %v2575, %v2577
        %v2579 = vrot.slane %v2526, %v2578
        %v2581 = vunpack.c.l.s4 1985246804
        %v2582 = vunpack.c.0.s8 %v2581
        %v2583 = vlaneseq
        %v2584 = vshrl.u32 %v2583, 7
        %v2585 = vsub.s32 %v2582, %v2584
        %v2586 = vrot.slane %v2526, %v2585
        %v2595 = vmul.f32 %v2463, %v2537
        %v2596 = vmul.f32 %v2464, %v2544
        %v2597 = vmul.f32 %v2465, %v2551
        %v2598 = vmul.f32 %v2466, %v2558
        %v2599 = vmul.f32 %v2467, %v2565
        %v2600 = vmul.f32 %v2468, %v2572
        %v2601 = vmul.f32 %v2469, %v2579
        %v2602 = vmul.f32 %v2470, %v2586
        %v2603 = vmul.f32 %v2595, %v2040
        %v2604 = vmul.f32 %v2596, %v2042
        %v2605 = vmul.f32 %v2597, %v2040
        %v2606 = vmul.f32 %v2598, %v2042
        %v2607 = vmul.f32 %v2599, %v2040
        %v2608 = vmul.f32 %v2600, %v2042
        %v2609 = vmul.f32 %v2601, %v2040
        %v2610 = vmul.f32 %v2602, %v2042
        %v2611 = vadd.f32 %v2603, %v2054
        %v2612 = vadd.f32 %v2604, %v2056
        %v2613 = vadd.f32 %v2605, %v2054
        %v2614 = vadd.f32 %v2606, %v2056
        %v2615 = vadd.f32 %v2607, %v2054
        %v2616 = vadd.f32 %v2608, %v2056
        %v2617 = vadd.f32 %v2609, %v2054
        %v2618 = vadd.f32 %v2610, %v2056
        %2627 = vrot.lane.b32.xlu0 %v2611, 112
        %v2628 = vpop.permute.xlu0 %2627
        %2629 = vrot.lane.b32.xlu0 %v2612, 112
        %v2630 = vpop.permute.xlu0 %2629
        %2631 = vrot.lane.b32.xlu0 %v2613, 112
        %v2632 = vpop.permute.xlu0 %2631
        %2633 = vrot.lane.b32.xlu0 %v2614, 112
        %v2634 = vpop.permute.xlu0 %2633
        %2635 = vrot.lane.b32.xlu0 %v2615, 112
        %v2636 = vpop.permute.xlu0 %2635
        %2637 = vrot.lane.b32.xlu0 %v2616, 112
        %v2638 = vpop.permute.xlu0 %2637
        %2639 = vrot.lane.b32.xlu0 %v2617, 112
        %v2640 = vpop.permute.xlu0 %2639
        %2641 = vrot.lane.b32.xlu0 %v2618, 112
        %v2642 = vpop.permute.xlu0 %2641
        %v2651 = vadd.f32 %v2359, %v2628
        %v2652 = vadd.f32 %v2360, %v2630
        %v2653 = vadd.f32 %v2361, %v2632
        %v2654 = vadd.f32 %v2362, %v2634
        %v2655 = vadd.f32 %v2363, %v2636
        %v2656 = vadd.f32 %v2364, %v2638
        %v2657 = vadd.f32 %v2365, %v2640
        %v2658 = vadd.f32 %v2366, %v2642
        %v2667 = vcombine.low %v1787, %v1788
        %v2668 = vcombine.low %v1789, %v1790
        %v2669 = vcombine.low %v1791, %v1792
        %v2670 = vcombine.low %v1793, %v1794
        %2671 = vrot.lane.b32.xlu0 %v2667, 96
        %v2672 = vpop.permute.xlu0 %2671
        %2673 = vrot.lane.b32.xlu0 %v2668, 96
        %v2674 = vpop.permute.xlu0 %2673
        %2675 = vrot.lane.b32.xlu0 %v2669, 96
        %v2676 = vpop.permute.xlu0 %2675
        %2677 = vrot.lane.b32.xlu0 %v2670, 96
        %v2678 = vpop.permute.xlu0 %2677
        %v2683 = vcombine.low %v2059, %v2060
        %v2684 = vcombine.low %v2061, %v2062
        %v2685 = vcombine.low %v2063, %v2064
        %v2686 = vcombine.low %v2065, %v2066
        %2687 = vrot.lane.b32.xlu0 %v2683, 96
        %v2688 = vpop.permute.xlu0 %2687
        %2689 = vrot.lane.b32.xlu0 %v2684, 96
        %v2690 = vpop.permute.xlu0 %2689
        %2691 = vrot.lane.b32.xlu0 %v2685, 96
        %v2692 = vpop.permute.xlu0 %2691
        %2693 = vrot.lane.b32.xlu0 %v2686, 96
        %v2694 = vpop.permute.xlu0 %2693
        %v2707 = vcombine.low %v2351, %v2352
        %v2708 = vcombine.low %v2353, %v2354
        %v2709 = vcombine.low %v2355, %v2356
        %v2710 = vcombine.low %v2357, %v2358
        %v2715 = vcombine.low %v2611, %v2612
        %v2716 = vcombine.low %v2613, %v2614
        %v2717 = vcombine.low %v2615, %v2616
        %v2718 = vcombine.low %v2617, %v2618
        %v2723 = vsel %vm345, %v2672, %v2688
        %v2724 = vsel %vm345, %v2674, %v2690
        %v2725 = vsel %vm345, %v2676, %v2692
        %v2726 = vsel %vm345, %v2678, %v2694
        %v2727 = vsel %vm1513, %v2723, %v2707
        %v2728 = vsel %vm1513, %v2724, %v2708
        %v2729 = vsel %vm1513, %v2725, %v2709
        %v2730 = vsel %vm1513, %v2726, %v2710
        %v2731 = vsel %vm1518, %v2727, %v2715
        %v2732 = vsel %vm1518, %v2728, %v2716
        %v2733 = vsel %vm1518, %v2729, %v2717
        %v2734 = vsel %vm1518, %v2730, %v2718
        %v2735 = vmul.f32 %v2651, 0.25
        %v2736 = vmul.f32 %v2652, 0.25
        %v2737 = vmul.f32 %v2653, 0.25
        %v2738 = vmul.f32 %v2654, 0.25
        %v2739 = vmul.f32 %v2655, 0.25
        %v2740 = vmul.f32 %v2656, 0.25
        %v2741 = vmul.f32 %v2657, 0.25
        %v2742 = vmul.f32 %v2658, 0.25
        %v2743 = vpack.c.bf16 %v1520, %v1519
        %v2744 = vpack.c.bf16 %v1522, %v1521
        %v2745 = vpack.c.bf16 %v2732, %v2731
        %v2746 = vpack.c.bf16 %v2734, %v2733
        %v2747 = vld [vmem:[#allocation5] sm:$0xf]
        %v2748 = vld [vmem:[#allocation5 + $0x4] sm:$0xf]
        %v2749 = vld [vmem:[#allocation5 + $0x8] sm:$0xf]
        %v2750 = vld [vmem:[#allocation5 + $0xc] sm:$0xf]
        %v2751 = vld [vmem:[#allocation5 + $0x10] sm:$0xf]
        %v2752 = vld [vmem:[#allocation5 + $0x14] sm:$0xf]
        %v2753 = vld [vmem:[#allocation5 + $0x18] sm:$0xf]
        %v2754 = vld [vmem:[#allocation5 + $0x1c] sm:$0xf]
        %v2755 = vld [vmem:[%s3] sm:$0x1]
        %v2756 = vlaneseq
        %v2757 = vshrl.u32 %v2756, 7
        %v2758 = vsub.s32 0, %v2757
        %v2759 = vrot.slane %v2755, %v2758
        %v2768 = vunpack.c.l.b16 %v2747
        %v2769 = vunpack.c.l.b16 %v2748
        %v2770 = vunpack.c.l.b16 %v2749
        %v2771 = vunpack.c.l.b16 %v2750
        %v2772 = vunpack.c.l.b16 %v2751
        %v2773 = vunpack.c.l.b16 %v2752
        %v2774 = vunpack.c.l.b16 %v2753
        %v2775 = vunpack.c.l.b16 %v2754
        %v2776 = vpack.c.b16 %v2769, %v2768
        %v2777 = vpack.c.b16 %v2771, %v2770
        %v2778 = vpack.c.b16 %v2773, %v2772
        %v2779 = vpack.c.b16 %v2775, %v2774
        %vm2784 = vcmask 523264
        %v2786 = vsel %vm2784, %v2743, 0
        %v2789 = vsel %vm2784, %v2744, 0
        %v2792 = vsel %vm2784, %v2745, 0
        %v2795 = vsel %vm2784, %v2746, 0
        %2797 = vmatprep.subr.bf16.mxu0 0
        %2798 = vmatpush1.bf16.msra.mxu0 %v2776
        %2799 = vmatprep.subr.bf16.mxu0 0
        %2800 = vmatpush1.bf16.msra.mxu0 %v2777
        %2801 = vmatprep.subr.bf16.mxu0 0
        %2802 = vmatpush1.bf16.msra.mxu0 %v2778
        %2803 = vmatprep.subr.bf16.mxu0 0
        %2804 = vmatpush1.bf16.msra.mxu0 %v2779
        %2805 = vmatprep.subr.bf16.mxu0 0
        %2806 = vmatpush1.bf16.msra.mxu0 0
        %2807 = vmatprep.subr.bf16.mxu0 0
        %2808 = vmatpush1.bf16.msra.mxu0 0
        %2809 = vmatprep.subr.bf16.mxu0 0
        %2810 = vmatpush1.bf16.msra.mxu0 0
        %2811 = vmatprep.subr.bf16.mxu0 0
        %2812 = vmatpush1.bf16.msra.mxu0 0
        %2813 = vmatprep.subr.bf16.mxu0 0
        %2814 = vmatpush1.bf16.msra.mxu0 0
        %2815 = vmatprep.subr.bf16.mxu0 0
        %2816 = vmatpush1.bf16.msra.mxu0 0
        %2817 = vmatprep.subr.bf16.mxu0 0
        %2818 = vmatpush1.bf16.msra.mxu0 0
        %2819 = vmatprep.subr.bf16.mxu0 0
        %2820 = vmatpush1.bf16.msra.mxu0 0
        %2821 = vmatprep.subr.bf16.mxu0 0
        %2822 = vmatpush1.bf16.msra.mxu0 0
        %2823 = vmatprep.subr.bf16.mxu0 0
        %2824 = vmatpush1.bf16.msra.mxu0 0
        %2825 = vmatprep.subr.bf16.mxu0 0
        %2826 = vmatpush1.bf16.msra.mxu0 0
        %2827 = vmatprep.subr.bf16.mxu0 0
        %2828 = vmatpush1.bf16.msra.mxu0 0
        %2829 = vmatprep.mubr.bf16.mxu0 0
        %2830 = vmatmul.mubr.bf16.gmra.mrb[0].mxu0 %v2786
        %v2831 = vpop.f32.mrb[0].mxu0
        %v2832 = vadd.f32 %v2759, %v2831
        %v2833 = vpop.f32.mrb[0].mxu0
        %v2834 = vpop.f32.mrb[0].mxu0
        %v2835 = vadd.f32 %v2759, %v2834
        %v2836 = vpop.f32.mrb[0].mxu0
        %2837 = vmatprep.mubr.bf16.mxu0 0
        %2838 = vmatmul.mubr.bf16.gmra.mrb[0].mxu0 %v2789
        %v2839 = vpop.f32.mrb[0].mxu0
        %v2840 = vadd.f32 %v2759, %v2839
        %v2841 = vpop.f32.mrb[0].mxu0
        %v2842 = vpop.f32.mrb[0].mxu0
        %v2843 = vadd.f32 %v2759, %v2842
        %v2844 = vpop.f32.mrb[0].mxu0
        %2845 = vmatprep.mubr.bf16.mxu0 0
        %2846 = vmatmul.mubr.bf16.gmra.mrb[0].mxu0 %v2792
        %v2847 = vpop.f32.mrb[0].mxu0
        %v2848 = vadd.f32 %v2759, %v2847
        %v2849 = vpop.f32.mrb[0].mxu0
        %v2850 = vpop.f32.mrb[0].mxu0
        %v2851 = vadd.f32 %v2759, %v2850
        %v2852 = vpop.f32.mrb[0].mxu0
        %2853 = vmatprep.mubr.bf16.mxu0 0
        %2854 = vmatmul.mubr.bf16.gmra.mrb[0].mxu0 %v2795
        %v2855 = vpop.f32.mrb[0].mxu0
        %v2856 = vadd.f32 %v2759, %v2855
        %v2857 = vpop.f32.mrb[0].mxu0
        %v2858 = vpop.f32.mrb[0].mxu0
        %v2859 = vadd.f32 %v2759, %v2858
        %v2860 = vpop.f32.mrb[0].mxu0
        %2861 = vdwg.mxu0
        %v2862 = vsel %vm2784, %v2832, 0.0
        %2863 = vadd.xlane.f32.xlu0 %v2862
        %v2864 = vpop.xlane.xlu0 %2863
        %v2865 = vsel %vm2784, %v2835, 0.0
        %2866 = vadd.xlane.f32.xlu0 %v2865
        %v2867 = vpop.xlane.xlu0 %2866
        %v2868 = vsel %vm2784, %v2840, 0.0
        %2869 = vadd.xlane.f32.xlu0 %v2868
        %v2870 = vpop.xlane.xlu0 %2869
        %v2871 = vsel %vm2784, %v2843, 0.0
        %2872 = vadd.xlane.f32.xlu0 %v2871
        %v2873 = vpop.xlane.xlu0 %2872
        %v2874 = vsel %vm2784, %v2848, 0.0
        %2875 = vadd.xlane.f32.xlu0 %v2874
        %v2876 = vpop.xlane.xlu0 %2875
        %v2877 = vsel %vm2784, %v2851, 0.0
        %2878 = vadd.xlane.f32.xlu0 %v2877
        %v2879 = vpop.xlane.xlu0 %2878
        %v2880 = vsel %vm2784, %v2856, 0.0
        %2881 = vadd.xlane.f32.xlu0 %v2880
        %v2882 = vpop.xlane.xlu0 %2881
        %v2883 = vsel %vm2784, %v2859, 0.0
        %2884 = vadd.xlane.f32.xlu0 %v2883
        %v2885 = vpop.xlane.xlu0 %2884
        %v2886 = vrcp.pop 64.0
        %v2887 = vmul.f32 %v2864, %v2886
        %v2888 = vmul.f32 %v2867, %v2886
        %v2889 = vmul.f32 %v2870, %v2886
        %v2890 = vmul.f32 %v2873, %v2886
        %v2891 = vmul.f32 %v2876, %v2886
        %v2892 = vmul.f32 %v2879, %v2886
        %v2893 = vmul.f32 %v2882, %v2886
        %v2894 = vmul.f32 %v2885, %v2886
        %v2895 = vsub.f32 %v2832, %v2887
        %v2896 = vsub.f32 %v2835, %v2888
        %v2897 = vsub.f32 %v2840, %v2889
        %v2898 = vsub.f32 %v2843, %v2890
        %v2899 = vsub.f32 %v2848, %v2891
        %v2900 = vsub.f32 %v2851, %v2892
        %v2901 = vsub.f32 %v2856, %v2893
        %v2902 = vsub.f32 %v2859, %v2894
        %v2903 = vmul.f32 %v2895, %v2895
        %v2904 = vmul.f32 %v2896, %v2896
        %v2905 = vmul.f32 %v2897, %v2897
        %v2906 = vmul.f32 %v2898, %v2898
        %v2907 = vmul.f32 %v2899, %v2899
        %v2908 = vmul.f32 %v2900, %v2900
        %v2909 = vmul.f32 %v2901, %v2901
        %v2910 = vmul.f32 %v2902, %v2902
        %v2911 = vsel %vm2784, %v2903, 0.0
        %2912 = vadd.xlane.f32.xlu0 %v2911
        %v2913 = vpop.xlane.xlu0 %2912
        %v2914 = vsel %vm2784, %v2904, 0.0
        %2915 = vadd.xlane.f32.xlu0 %v2914
        %v2916 = vpop.xlane.xlu0 %2915
        %v2917 = vsel %vm2784, %v2905, 0.0
        %2918 = vadd.xlane.f32.xlu0 %v2917
        %v2919 = vpop.xlane.xlu0 %2918
        %v2920 = vsel %vm2784, %v2906, 0.0
        %2921 = vadd.xlane.f32.xlu0 %v2920
        %v2922 = vpop.xlane.xlu0 %2921
        %v2923 = vsel %vm2784, %v2907, 0.0
        %2924 = vadd.xlane.f32.xlu0 %v2923
        %v2925 = vpop.xlane.xlu0 %2924
        %v2926 = vsel %vm2784, %v2908, 0.0
        %2927 = vadd.xlane.f32.xlu0 %v2926
        %v2928 = vpop.xlane.xlu0 %2927
        %v2929 = vsel %vm2784, %v2909, 0.0
        %2930 = vadd.xlane.f32.xlu0 %v2929
        %v2931 = vpop.xlane.xlu0 %2930
        %v2932 = vsel %vm2784, %v2910, 0.0
        %2933 = vadd.xlane.f32.xlu0 %v2932
        %v2934 = vpop.xlane.xlu0 %2933
        %v2935 = vmul.f32 %v2913, %v2886
        %v2936 = vmul.f32 %v2916, %v2886
        %v2937 = vmul.f32 %v2919, %v2886
        %v2938 = vmul.f32 %v2922, %v2886
        %v2939 = vmul.f32 %v2925, %v2886
        %v2940 = vmul.f32 %v2928, %v2886
        %v2941 = vmul.f32 %v2931, %v2886
        %v2942 = vmul.f32 %v2934, %v2886
        %v2943 = vadd.f32 %v2935, 1e-06
        %v2944 = vadd.f32 %v2936, 1e-06
        %v2945 = vadd.f32 %v2937, 1e-06
        %v2946 = vadd.f32 %v2938, 1e-06
        %v2947 = vadd.f32 %v2939, 1e-06
        %v2948 = vadd.f32 %v2940, 1e-06
        %v2949 = vadd.f32 %v2941, 1e-06
        %v2950 = vadd.f32 %v2942, 1e-06
        %v2951 = vrsqrt.pop %v2943
        %v2952 = vrsqrt.pop %v2944
        %v2953 = vrsqrt.pop %v2945
        %v2954 = vrsqrt.pop %v2946
        %v2955 = vrsqrt.pop %v2947
        %v2956 = vrsqrt.pop %v2948
        %v2957 = vrsqrt.pop %v2949
        %v2958 = vrsqrt.pop %v2950
        %v2959 = vmul.f32 %v2895, %v2951
        %v2960 = vmul.f32 %v2896, %v2952
        %v2961 = vmul.f32 %v2897, %v2953
        %v2962 = vmul.f32 %v2898, %v2954
        %v2963 = vmul.f32 %v2899, %v2955
        %v2964 = vmul.f32 %v2900, %v2956
        %v2965 = vmul.f32 %v2901, %v2957
        %v2966 = vmul.f32 %v2902, %v2958
        %2971 = vrot.lane.b32.xlu0 %v2963, 64
        %v2972 = vpop.permute.xlu0 %2971
        %2973 = vrot.lane.b32.xlu0 %v2964, 64
        %v2974 = vpop.permute.xlu0 %2973
        %2975 = vrot.lane.b32.xlu0 %v2965, 64
        %v2976 = vpop.permute.xlu0 %2975
        %2977 = vrot.lane.b32.xlu0 %v2966, 64
        %v2978 = vpop.permute.xlu0 %2977
        %v2983 = vsel %vm2784, %v2959, %v2972
        %v2984 = vsel %vm2784, %v2960, %v2974
        %v2985 = vsel %vm2784, %v2961, %v2976
        %v2986 = vsel %vm2784, %v2962, %v2978
        %v2995 = vcombine.low %v1523, %v1524
        %v2996 = vcombine.low %v1525, %v1526
        %v2997 = vcombine.low %v1527, %v1528
        %v2998 = vcombine.low %v1529, %v1530
        %3003 = vrot.lane.b32.xlu0 %v2995, 16
        %v3004 = vpop.permute.xlu0 %3003
        %3005 = vrot.lane.b32.xlu0 %v2996, 16
        %v3006 = vpop.permute.xlu0 %3005
        %3007 = vrot.lane.b32.xlu0 %v2997, 16
        %v3008 = vpop.permute.xlu0 %3007
        %3009 = vrot.lane.b32.xlu0 %v2998, 16
        %v3010 = vpop.permute.xlu0 %3009
        %3015 = vrot.lane.b32.xlu0 %v2995, 32
        %v3016 = vpop.permute.xlu0 %3015
        %3017 = vrot.lane.b32.xlu0 %v2996, 32
        %v3018 = vpop.permute.xlu0 %3017
        %3019 = vrot.lane.b32.xlu0 %v2997, 32
        %v3020 = vpop.permute.xlu0 %3019
        %3021 = vrot.lane.b32.xlu0 %v2998, 32
        %v3022 = vpop.permute.xlu0 %3021
        %3027 = vrot.lane.b32.xlu0 %v2995, 48
        %v3028 = vpop.permute.xlu0 %3027
        %3029 = vrot.lane.b32.xlu0 %v2996, 48
        %v3030 = vpop.permute.xlu0 %3029
        %3031 = vrot.lane.b32.xlu0 %v2997, 48
        %v3032 = vpop.permute.xlu0 %3031
        %3033 = vrot.lane.b32.xlu0 %v2998, 48
        %v3034 = vpop.permute.xlu0 %3033
        %v3047 = vcombine.low %v2735, %v2736
        %v3048 = vcombine.low %v2737, %v2738
        %v3049 = vcombine.low %v2739, %v2740
        %v3050 = vcombine.low %v2741, %v2742
        %3051 = vrot.lane.b32.xlu0 %v3047, 32
        %v3052 = vpop.permute.xlu0 %3051
        %3053 = vrot.lane.b32.xlu0 %v3048, 32
        %v3054 = vpop.permute.xlu0 %3053
        %3055 = vrot.lane.b32.xlu0 %v3049, 32
        %v3056 = vpop.permute.xlu0 %3055
        %3057 = vrot.lane.b32.xlu0 %v3050, 32
        %v3058 = vpop.permute.xlu0 %3057
        %3063 = vrot.lane.b32.xlu0 %v3047, 48
        %v3064 = vpop.permute.xlu0 %3063
        %3065 = vrot.lane.b32.xlu0 %v3048, 48
        %v3066 = vpop.permute.xlu0 %3065
        %3067 = vrot.lane.b32.xlu0 %v3049, 48
        %v3068 = vpop.permute.xlu0 %3067
        %3069 = vrot.lane.b32.xlu0 %v3050, 48
        %v3070 = vpop.permute.xlu0 %3069
        %3075 = vrot.lane.b32.xlu0 %v3047, 64
        %v3076 = vpop.permute.xlu0 %3075
        %3077 = vrot.lane.b32.xlu0 %v3048, 64
        %v3078 = vpop.permute.xlu0 %3077
        %3079 = vrot.lane.b32.xlu0 %v3049, 64
        %v3080 = vpop.permute.xlu0 %3079
        %3081 = vrot.lane.b32.xlu0 %v3050, 64
        %v3082 = vpop.permute.xlu0 %3081
        %3087 = vrot.lane.b32.xlu0 %v3047, 80
        %v3088 = vpop.permute.xlu0 %3087
        %3089 = vrot.lane.b32.xlu0 %v3048, 80
        %v3090 = vpop.permute.xlu0 %3089
        %3091 = vrot.lane.b32.xlu0 %v3049, 80
        %v3092 = vpop.permute.xlu0 %3091
        %3093 = vrot.lane.b32.xlu0 %v3050, 80
        %v3094 = vpop.permute.xlu0 %3093
        %v3099 = vsel %vm345, %v2995, %v3004
        %v3100 = vsel %vm345, %v2996, %v3006
        %v3101 = vsel %vm345, %v2997, %v3008
        %v3102 = vsel %vm345, %v2998, %v3010
        %v3103 = vsel %vm1513, %v3099, %v3016
        %v3104 = vsel %vm1513, %v3100, %v3018
        %v3105 = vsel %vm1513, %v3101, %v3020
        %v3106 = vsel %vm1513, %v3102, %v3022
        %v3107 = vsel %vm1518, %v3103, %v3028
        %v3108 = vsel %vm1518, %v3104, %v3030
        %v3109 = vsel %vm1518, %v3105, %v3032
        %v3110 = vsel %vm1518, %v3106, %v3034
        %v3111 = vsel %vm2784, %v3107, %v3052
        %v3112 = vsel %vm2784, %v3108, %v3054
        %v3113 = vsel %vm2784, %v3109, %v3056
        %v3114 = vsel %vm2784, %v3110, %v3058
        %vm3115 = vcmask 654336
        %v3116 = vsel %vm3115, %v3111, %v3064
        %v3117 = vsel %vm3115, %v3112, %v3066
        %v3118 = vsel %vm3115, %v3113, %v3068
        %v3119 = vsel %vm3115, %v3114, %v3070
        %vm3120 = vcmask 785408
        %v3121 = vsel %vm3120, %v3116, %v3076
        %v3122 = vsel %vm3120, %v3117, %v3078
        %v3123 = vsel %vm3120, %v3118, %v3080
        %v3124 = vsel %vm3120, %v3119, %v3082
        %vm3125 = vcmask 916480
        %v3126 = vsel %vm3125, %v3121, %v3088
        %v3127 = vsel %vm3125, %v3122, %v3090
        %v3128 = vsel %vm3125, %v3123, %v3092
        %v3129 = vsel %vm3125, %v3124, %v3094
        %v3130 = vld [vmem:[%s3 + $0x1] sm:$0x1]
        %v3131 = vlaneseq
        %v3132 = vshrl.u32 %v3131, 7
        %v3133 = vsub.s32 0, %v3132
        %v3134 = vrot.slane %v3130, %v3133
        %v3135 = vmul.f32 %v2983, %v3134
        %v3136 = vmul.f32 %v2984, %v3134
        %v3137 = vmul.f32 %v2985, %v3134
        %v3138 = vmul.f32 %v2986, %v3134
        %v3139 = vld [vmem:[%s3 + $0x2] sm:$0x1]
        %v3140 = vlaneseq
        %v3141 = vshrl.u32 %v3140, 7
        %v3142 = vsub.s32 0, %v3141
        %v3143 = vrot.slane %v3139, %v3142
        %v3144 = vadd.f32 %v3135, %v3143
        %v3145 = vadd.f32 %v3136, %v3143
        %v3146 = vadd.f32 %v3137, %v3143
        %v3147 = vadd.f32 %v3138, %v3143
        %v3148 = vadd.f32 %v3144, %v3126
        %v3149 = vadd.f32 %v3145, %v3127
        %v3150 = vadd.f32 %v3146, %v3128
        %v3151 = vadd.f32 %v3147, %v3129
        %v3152 = vld [vmem:[%s3 + $0x3] sm:$0x1]
        %v3153 = vlaneseq
        %v3154 = vshrl.u32 %v3153, 7
        %v3155 = vsub.s32 0, %v3154
        %v3156 = vrot.slane %v3152, %v3155
        %v3157 = vsub.f32 %v3148, %v3156
        %v3158 = vsub.f32 %v3149, %v3156
        %v3159 = vsub.f32 %v3150, %v3156
        %v3160 = vsub.f32 %v3151, %v3156
        %vm3161 = vcmp.ge.f32.partialorder %v3157, 0.0
        %vm3162 = vcmp.ge.f32.partialorder %v3158, 0.0
        %vm3163 = vcmp.ge.f32.partialorder %v3159, 0.0
        %vm3164 = vcmp.ge.f32.partialorder %v3160, 0.0
        %v3165 = vld [vmem:[%s3 + $0x4] sm:$0x1]
        %v3166 = vlaneseq
        %v3167 = vshrl.u32 %v3166, 7
        %v3168 = vsub.s32 0, %v3167
        %v3169 = vrot.slane %v3165, %v3168
        %v3170 = vmul.f32 %v3169, %v3157
        %v3171 = vmul.f32 %v3169, %v3158
        %v3172 = vmul.f32 %v3169, %v3159
        %v3173 = vmul.f32 %v3169, %v3160
        %v3174 = vsel %vm3161, %v3157, %v3170
        %v3175 = vsel %vm3162, %v3158, %v3171
        %v3176 = vsel %vm3163, %v3159, %v3172
        %v3177 = vsel %vm3164, %v3160, %v3173
        %v3178 = vld [vmem:[%s3 + $0x5] sm:$0x1]
        %v3179 = vlaneseq
        %v3180 = vshrl.u32 %v3179, 7
        %v3181 = vsub.s32 0, %v3180
        %v3182 = vrot.slane %v3178, %v3181
        %v3183 = vadd.f32 %v3174, %v3182
        %v3184 = vadd.f32 %v3175, %v3182
        %v3185 = vadd.f32 %v3176, %v3182
        %v3186 = vadd.f32 %v3177, %v3182
        %v3187 = vld [vmem:[#allocation7] sm:$0xff]
        %v3188 = vld [vmem:[#allocation7 + $0x8] sm:$0xff]
        %v3189 = vld [vmem:[#allocation7 + $0x10] sm:$0xff]
        %v3190 = vld [vmem:[#allocation7 + $0x18] sm:$0xff]
        %v3191 = vadd.f32 %v3183, %v3187
        %v3192 = vadd.f32 %v3184, %v3188
        %v3193 = vadd.f32 %v3185, %v3189
        %v3194 = vadd.f32 %v3186, %v3190
        %3195 = vst [vmem:[%s298] sm:$0xff] %v3191
        %3196 = vst [vmem:[%s298 + $0x8] sm:$0xff] %v3192
        %3197 = vst [vmem:[%s298 + $0x10] sm:$0xff] %v3193
        %3198 = vst [vmem:[%s298 + $0x18] sm:$0xff] %v3194
        %s3199 = sand.u32 %s162, 1
        %s3200 = scalar_lea.sflag [#allocation4], %s3199
        %s3201 = sand.u32 %s162, 1
        %s3202 = smul.addr %s3201, 32
        %s3203 = scalar_lea.vmem [#allocation8], %s3202
        // Predicated region
        $region53: #{tpu_custom_call.1} parent=39 // pred_check
          %p3204 = pneg %p172
        $region54: #{tpu_custom_call.1} parent=39 // pred_check_branch
          %3206 = sbr.rel (%p3204) target = $region56
        $region55: #{tpu_custom_call.1} parent=39 // pred_region
          %s3207 = smul.u32 4, %s27
          %s3209 = ssub.s32 512, 512
          %3210 = vsyncadd %s3200, %s3209
          %s3211 = smul.addr %s28, 4
          %s3212 = sadd.s32 %s3207, %s3211
          %s3213 = smul.addr %s3212, 128
          %s3214 = scalar_lea.hbm %s5, %s3213
          %s3215 = sshll.u32 %s3203, 4
          %s3216 = int_to_ptr.vmem [resolvable:$true] %s3215
          %3221 = dma.vmem_to_hbm [thread:$0]  %s3216, 512, %s3214, %s3200, 128, 128, 8
        $region56: #{tpu_custom_call.1} parent=39 // pred_fallthru
          _
      $region40: #{tpu_custom_call.1} parent=5 // pred_fallthru
        _
      %p3222 = scmp.le.s32.totalorder 2, %s18
      // Predicated region
      $region57: #{tpu_custom_call.1} parent=5 // pred_check
        %p3223 = pneg %p3222
      $region58: #{tpu_custom_call.1} parent=5 // pred_check_branch
        %3225 = sbr.rel (%p3223) target = $region60
      $region59: #{tpu_custom_call.1} parent=5 // pred_region
        %s3226 = ssub.s32 %s18, 2
        // Predicated region
        $region61: #{tpu_custom_call.1} parent=59 // pred_check
          %p3227 = pneg %p178
        $region62: #{tpu_custom_call.1} parent=59 // pred_check_branch
          %3229 = sbr.rel (%p3227) target = $region64
        $region63: #{tpu_custom_call.1} parent=59 // pred_region
          %s3230 = sand.u32 %s163, 1
          %s3231 = scalar_lea.sflag [#allocation4], %s3230
          %s3232 = sand.u32 %s163, 1
          %s3233 = smul.addr %s3232, 32
          %s3234 = scalar_lea.vmem [#allocation8], %s3233
          %3235 = dma.done %s3231, 512
        $region64: #{tpu_custom_call.1} parent=59 // pred_fallthru
          _
      $region60: #{tpu_custom_call.1} parent=5 // pred_fallthru
        _
    $region6: #{tpu_custom_call.1} parent=1 // loop_footer
      %s22 = sadd.s32 1, %s18
    $region7: #{tpu_custom_call.1} parent=1 // loop_footer_branch
      %17 = sbr.rel target = $region3
    $region8: #{tpu_custom_call.1} parent=1 // loop_exit
      _
    %3236 = vsyncpa [#allocation3], 1
    %s3237 = scalar_lea.sflag [#allocation3], 1
    %3238 = vsyncpa %s3237, 1
    %3239 = vsyncpa [#allocation6], 1
    %3240 = vsyncpa [#allocation4], 1
    %s3241 = scalar_lea.sflag [#allocation4], 1
    %3242 = vsyncpa %s3241, 1

</llo_original>
